<compile_context>
chip_gen: v6e
topology: v6e:2x2x1
jax: 0.10.0
libtpu: 0.0.40
codegen_flags: <defaults>
</compile_context>

<pallas_src>
import jax
import jax.numpy as jnp
from jax.experimental import pallas as pl
from jax.experimental.pallas import tpu as pltpu

NEG_SLOPE = 0.01   # F.leaky_relu default
BN_EPS = 1e-5


def _leaky_relu(x):
    return jnp.maximum(x, NEG_SLOPE * x)


def _round_up(n, m=128):
    return ((n + m - 1) // m) * m


def _pad_to(a, shape):
    return jnp.pad(a, [(0, s - d) for d, s in zip(a.shape, shape)])


# --------------------------------------------------------------------------
# Kernel
# --------------------------------------------------------------------------
def resblock_kernel(x_ref, hal_ref, w1_ref, b1_ref, w2_ref, b2_ref, w3_ref,
                    b3_ref, o_ref, t3_ref):
    _, TH, W, Cip = x_ref.shape
    Cmp = w1_ref.shape[1]
    Cop = w3_ref.shape[1]
    ih = pl.program_id(1)
    last = pl.num_programs(1) - 1

    # ---- conv1 (1x1, BN1 scale folded) on tile rows + halo rows, ONE matmul -
    xb = x_ref[...].reshape(TH * W, Cip)                 # bf16
    hb = hal_ref[...].reshape(2 * W, Cip)                # bf16
    lhs1 = jnp.concatenate([xb, hb], axis=0)             # (TH*W + 2W, Cip)
    t_all = jnp.dot(lhs1, w1_ref[...], preferred_element_type=jnp.float32)
    t_all = _leaky_relu(t_all + b1_ref[...])             # f32
    # dropout(p=0.3): identity in inference mode

    t = t_all[:TH * W].reshape(TH, W, Cmp)
    th = t_all[TH * W:].reshape(2, W, Cmp)
    t_top = jnp.where(ih > 0, th[0], 0.0).reshape(1, W, Cmp)     # zero above image
    t_bot = jnp.where(ih < last, th[1], 0.0).reshape(1, W, Cmp)  # zero below image

    tfull = jnp.concatenate([t_top, t, t_bot], axis=0)   # (TH+2, W, Cmp) f32

    # ---- conv2 staging: three kw-shifted copies (zero W-borders baked in),
    #      lane-concatenated, one aligned full-tile bf16 store ----------------
    zcol = jnp.zeros((TH + 2, 1, Cmp), jnp.float32)
    tap_l = jnp.concatenate([zcol, tfull[:, :W - 1, :]], axis=1)   # t[.., w-1]
    tap_r = jnp.concatenate([tfull[:, 1:, :], zcol], axis=1)       # t[.., w+1]
    t3_ref[...] = jnp.concatenate([tap_l, tfull, tap_r],
                                  axis=-1).astype(jnp.bfloat16)    # (TH+2, W, 3*Cmp)

    # ---- conv2 (3x3 SAME, BN2 folded): 3 accumulating matmuls, K = 3*Cmp ----
    u = b2_ref[...]                                       # (1, Cmp) f32, broadcasts
    for kh in range(3):
        lhs2 = t3_ref[kh:kh + TH].reshape(TH * W, 3 * Cmp)   # aligned row slice
        u = u + jnp.dot(lhs2, w2_ref[kh], preferred_element_type=jnp.float32)
    u = _leaky_relu(u)                                    # (TH*W, Cmp) f32
    # dropout(p=0.3): identity in inference mode

    # ---- conv3 (1x1, BN3 folded) + bias + residual + leaky_relu --------------
    y = jnp.dot(u.astype(jnp.bfloat16), w3_ref[...],
                preferred_element_type=jnp.float32)
    res = x_ref[...].reshape(TH * W, Cip).astype(jnp.float32)   # re-read (Cip == Cop)
    y = _leaky_relu(y + b3_ref[...] + res)
    o_ref[...] = y.reshape(1, TH, W, Cop)
    # dropout(p=0.3): identity in inference mode


# --------------------------------------------------------------------------
# Wrapper
# --------------------------------------------------------------------------
def resblock_forward(x_nchw, folded, tile_h=32):
    w1f, b1, w2f, b2, w3f, b3 = folded
    Cin, Cmid = w1f.shape
    Cout = w3f.shape[1]
    assert Cin == Cout, "residual add requires inplanes == planes (no downsample)"

    Cip = _round_up(Cin)
    Cmp = _round_up(Cmid)
    Cop = _round_up(Cout)

    # ---- wrapper-side layout plumbing (XLA, outside the kernel) -------------
    x = jnp.transpose(x_nchw, (0, 2, 3, 1)).astype(jnp.bfloat16)      # NHWC bf16
    N, H, W, _ = x.shape
    TH = min(tile_h, H)
    assert H % TH == 0, f"H={H} must be divisible by tile_h={TH}"
    assert W % 8 == 0, f"W={W} must be a multiple of 8 (sublane)"
    nH = H // TH

    x_p = _pad_to(x, (N, H, W, Cip))

    # one-row halos above/below each H tile (border rows masked in-kernel)
    rows = jnp.arange(nH) * TH
    top_src = jnp.clip(rows - 1, 0, H - 1)
    bot_src = jnp.clip(rows + TH, 0, H - 1)
    halo = jnp.stack([x_p[:, top_src], x_p[:, bot_src]], axis=2)      # (N,nH,2,W,Cip)
    halo = halo.reshape(N * nH, 2, W, Cip)

    # pad channels to lane multiples; pack w2 as (kh, kw*Cmp + cin, cout)
    w1p = _pad_to(w1f, (Cip, Cmp))                                    # bf16
    w2p = _pad_to(w2f, (3, 3, Cmp, Cmp)).reshape(3, 3 * Cmp, Cmp)     # bf16
    w3p = _pad_to(w3f, (Cmp, Cop))                                    # bf16
    b1p = _pad_to(b1, (Cmp,)).reshape(1, Cmp).astype(jnp.float32)
    b2p = _pad_to(b2, (Cmp,)).reshape(1, Cmp).astype(jnp.float32)
    b3p = _pad_to(b3, (Cop,)).reshape(1, Cop).astype(jnp.float32)

    in_specs = [
        pl.BlockSpec((1, TH, W, Cip), lambda n, ih: (n, ih, 0, 0)),
        pl.BlockSpec((1, 2, W, Cip), lambda n, ih: (n * nH + ih, 0, 0, 0)),
        pl.BlockSpec((Cip, Cmp), lambda n, ih: (0, 0)),
        pl.BlockSpec((1, Cmp), lambda n, ih: (0, 0)),
        pl.BlockSpec((3, 3 * Cmp, Cmp), lambda n, ih: (0, 0, 0)),
        pl.BlockSpec((1, Cmp), lambda n, ih: (0, 0)),
        pl.BlockSpec((Cmp, Cop), lambda n, ih: (0, 0)),
        pl.BlockSpec((1, Cop), lambda n, ih: (0, 0)),
    ]
    out_specs = pl.BlockSpec((1, TH, W, Cop), lambda n, ih: (n, ih, 0, 0))

    out = pl.pallas_call(
        resblock_kernel,
        out_shape=jax.ShapeDtypeStruct((N, H, W, Cop), jnp.float32),
        grid_spec=pltpu.PrefetchScalarGridSpec(
            num_scalar_prefetch=0,
            grid=(N, nH),
            in_specs=in_specs,
            out_specs=out_specs,
            scratch_shapes=[pltpu.VMEM((TH + 2, W, 3 * Cmp), jnp.bfloat16)],
        ),
        compiler_params=pltpu.CompilerParams(
            dimension_semantics=("parallel", "parallel"),
            vmem_limit_bytes=48 * 1024 * 1024,
        ),
    )(x_p, halo, w1p, b1p, w2p, b2p, w3p, b3p)

    out = out[..., :Cout]
    return jnp.transpose(out, (0, 3, 1, 2))                           # back to NCHW


# --------------------------------------------------------------------------
# Parameters (raw, PyTorch-like) and BN folding
# --------------------------------------------------------------------------
def init_params(key, inplanes, planes):
    cmid = planes // 4
    ks = jax.random.split(key, 15)
    # torch conv weights are (Cout, Cin, kh, kw); stored here pre-transposed:
    #   conv1: (Cin, Cmid)   conv2: (3,3,Cmid,Cmid) [HWIO]   conv3: (Cmid, Cout)
    w1 = (jax.random.normal(ks[0], (inplanes, cmid)) * 0.1).astype(jnp.float32)
    w2 = (jax.random.normal(ks[1], (3, 3, cmid, cmid)) * 0.1).astype(jnp.float32)
    w3 = (jax.random.normal(ks[2], (cmid, planes)) * 0.1).astype(jnp.float32)

    def bn(kg, kb, km, kv, c):
        gamma = jax.random.uniform(kg, (c,), minval=0.5, maxval=1.5)
        beta = jax.random.normal(kb, (c,)) * 0.1
        mean = jax.random.normal(km, (c,)) * 0.1
        var = jax.random.uniform(kv, (c,), minval=0.5, maxval=1.5)
        return (gamma.astype(jnp.float32), beta.astype(jnp.float32),
                mean.astype(jnp.float32), var.astype(jnp.float32))

    bn1 = bn(ks[3], ks[4], ks[5], ks[6], cmid)
    bn2 = bn(ks[7], ks[8], ks[9], ks[10], cmid)
    bn3 = bn(ks[11], ks[12], ks[13], ks[14], planes)
    return (w1, w2, w3, bn1, bn2, bn3)


def fold_params(raw):
    """Fold running-stat BN scale into the conv weights (bf16); biases stay f32."""
    w1, w2, w3, bn1, bn2, bn3 = raw

    def fold(w, bn, axis):
        gamma, beta, mean, var = bn
        scale = gamma / jnp.sqrt(var + BN_EPS)
        bias = (beta - mean * scale).astype(jnp.float32)
        shape = [1] * w.ndim
        shape[axis] = -1
        return (w * scale.reshape(shape)).astype(jnp.bfloat16), bias

    w1f, b1 = fold(w1, bn1, 1)
    w2f, b2 = fold(w2, bn2, 3)
    w3f, b3 = fold(w3, bn3, 1)
    return (w1f, b1, w2f, b2, w3f, b3)


# --------------------------------------------------------------------------
# Pure-JAX reference (lax.conv, same bf16 rounding as the kernel's matmuls)
# --------------------------------------------------------------------------
def ref_forward(x_nchw, folded):
    w1f, b1, w2f, b2, w3f, b3 = folded
    # kernel receives bf16 input, so the residual path is bf16-rounded too
    x = jnp.transpose(x_nchw, (0, 2, 3, 1)).astype(jnp.bfloat16).astype(jnp.float32)
    dn = ("NHWC", "HWIO", "NHWC")

    def conv(a, w, padding):
        a = a.astype(jnp.bfloat16).astype(jnp.float32)   # match in-kernel rounding
        return jax.lax.conv_general_dilated(a, w.astype(jnp.float32), (1, 1),
                                            padding, dimension_numbers=dn)

    t = _leaky_relu(conv(x, w1f[None, None], "VALID") + b1.reshape(1, 1, 1, -1))
    t = _leaky_relu(conv(t, w2f, "SAME") + b2.reshape(1, 1, 1, -1))
    y = conv(t, w3f[None, None], "VALID") + b3.reshape(1, 1, 1, -1)
    y = _leaky_relu(y + x)
    return jnp.transpose(y, (0, 3, 1, 2))


if __name__ == "__main__":
    key = jax.random.PRNGKey(0)
    kx, kp = jax.random.split(key)

    inplanes = planes = 32          # small stand-in for the default 240
    N, H, W = 2, 16, 16

    raw = init_params(kp, inplanes, planes)
    folded = fold_params(raw)
    x = jax.random.normal(kx, (N, inplanes, H, W), jnp.float32)   # NCHW like PyTorch

    # tile_h=8 keeps nH=2 at H=16 so the halo path is exercised; production
    # sizes should use the default tile_h=32 (M = TH*W >= 512).
    fwd = jax.jit(lambda a: resblock_forward(a, folded, tile_h=8))
    out = jax.block_until_ready(fwd(x))

    ref = ref_forward(x, folded)
    assert out.shape == (N, planes, H, W), out.shape
    max_err = float(jnp.max(jnp.abs(out - ref)))
    assert max_err < 1e-2, f"max_err={max_err}"

    print("KERNEL_OK")
</pallas_src>

<mosaic_0001>
module attributes {stable_mosaic.version = 11 : i64} {
  func.func @resblock_kernel(%arg0: i32, %arg1: i32, %arg2: memref<1x8x16x128xbf16, #tpu.memory_space<vmem>>, %arg3: memref<1x2x16x128xbf16, #tpu.memory_space<vmem>>, %arg4: memref<128x128xbf16, #tpu.memory_space<vmem>>, %arg5: memref<1x128xf32, #tpu.memory_space<vmem>>, %arg6: memref<3x384x128xbf16, #tpu.memory_space<vmem>>, %arg7: memref<1x128xf32, #tpu.memory_space<vmem>>, %arg8: memref<128x128xbf16, #tpu.memory_space<vmem>>, %arg9: memref<1x128xf32, #tpu.memory_space<vmem>>, %arg10: memref<1x8x16x128xf32, #tpu.memory_space<vmem>>, %arg11: memref<10x16x384xbf16, #tpu.memory_space<vmem>>) attributes {dimension_semantics = [#tpu.dimension_semantics<parallel>, #tpu.dimension_semantics<parallel>], iteration_bounds = array<i64: 2, 2>, scalar_prefetch = 0 : i64, scratch_operands = 1 : i64, tpu.core_type = #tpu.core_type<tc>, window_params = [{transform_indices = @transform_0, window_bounds = array<i64: 1, 8, 16, 128>}, {transform_indices = @transform_1, window_bounds = array<i64: 1, 2, 16, 128>}, {pipeline_mode = #tpu.pipeline_mode<synchronous>, transform_indices = @transform_2, window_bounds = array<i64: 128, 128>}, {pipeline_mode = #tpu.pipeline_mode<synchronous>, transform_indices = @transform_3, window_bounds = array<i64: 1, 128>}, {pipeline_mode = #tpu.pipeline_mode<synchronous>, transform_indices = @transform_4, window_bounds = array<i64: 3, 384, 128>}, {pipeline_mode = #tpu.pipeline_mode<synchronous>, transform_indices = @transform_5, window_bounds = array<i64: 1, 128>}, {pipeline_mode = #tpu.pipeline_mode<synchronous>, transform_indices = @transform_6, window_bounds = array<i64: 128, 128>}, {pipeline_mode = #tpu.pipeline_mode<synchronous>, transform_indices = @transform_7, window_bounds = array<i64: 1, 128>}, {transform_indices = @transform_8, window_bounds = array<i64: 1, 8, 16, 128>}]} {
    %c0 = arith.constant 0 : index
    %c0_0 = arith.constant 0 : index
    %c0_1 = arith.constant 0 : index
    %c0_2 = arith.constant 0 : index
    %0 = vector.load %arg2[%c0, %c0_0, %c0_1, %c0_2] : memref<1x8x16x128xbf16, #tpu.memory_space<vmem>>, vector<1x8x16x128xbf16>
    %1 = vector.shape_cast %0 : vector<1x8x16x128xbf16> to vector<128x128xbf16>
    %c0_3 = arith.constant 0 : index
    %c0_4 = arith.constant 0 : index
    %c0_5 = arith.constant 0 : index
    %c0_6 = arith.constant 0 : index
    %2 = vector.load %arg3[%c0_3, %c0_4, %c0_5, %c0_6] : memref<1x2x16x128xbf16, #tpu.memory_space<vmem>>, vector<1x2x16x128xbf16>
    %3 = vector.shape_cast %2 : vector<1x2x16x128xbf16> to vector<32x128xbf16>
    %4 = tpu.concatenate %1, %3 in 0 : vector<128x128xbf16>, vector<32x128xbf16> -> vector<160x128xbf16>
    %c0_7 = arith.constant 0 : index
    %c0_8 = arith.constant 0 : index
    %5 = vector.load %arg4[%c0_7, %c0_8] : memref<128x128xbf16, #tpu.memory_space<vmem>>, vector<128x128xbf16>
    %cst = arith.constant dense<0.000000e+00> : vector<160x128xf32>
    %6 = tpu.matmul %4, %5, %cst {dimension_numbers = #tpu.dot_dimension_numbers<[1], [0], [0], [1], [0, 0, 1, 1], [], []>} : vector<160x128xbf16>, vector<128x128xbf16>, vector<160x128xf32> -> vector<160x128xf32>
    %c0_9 = arith.constant 0 : index
    %c0_10 = arith.constant 0 : index
    %7 = vector.load %arg5[%c0_9, %c0_10] : memref<1x128xf32, #tpu.memory_space<vmem>>, vector<1x128xf32>
    %8 = vector.broadcast %7 : vector<1x128xf32> to vector<160x128xf32>
    %9 = arith.addf %6, %8 : vector<160x128xf32>
    %cst_11 = arith.constant 0.00999999977 : f32
    %10 = vector.broadcast %cst_11 : f32 to vector<160x128xf32>
    %11 = arith.mulf %10, %9 : vector<160x128xf32>
    %12 = arith.maximumf %9, %11 : vector<160x128xf32>
    %13 = vector.extract_strided_slice %12 {offsets = [0, 0], sizes = [128, 128], strides = [1, 1]} : vector<160x128xf32> to vector<128x128xf32>
    %14 = vector.shape_cast %13 : vector<128x128xf32> to vector<8x16x128xf32>
    %15 = vector.extract_strided_slice %12 {offsets = [128, 0], sizes = [32, 128], strides = [1, 1]} : vector<160x128xf32> to vector<32x128xf32>
    %16 = vector.shape_cast %15 : vector<32x128xf32> to vector<2x16x128xf32>
    %c0_i32 = arith.constant 0 : i32
    %17 = arith.cmpi sgt, %arg1, %c0_i32 : i32
    %18 = vector.extract_strided_slice %16 {offsets = [0, 0, 0], sizes = [1, 16, 128], strides = [1, 1, 1]} : vector<2x16x128xf32> to vector<1x16x128xf32>
    %19 = vector.shape_cast %18 : vector<1x16x128xf32> to vector<16x128xf32>
    %cst_12 = arith.constant 0.000000e+00 : f32
    %20 = vector.broadcast %cst_12 : f32 to vector<16x128xf32>
    %21 = arith.select %17, %19, %20 : vector<16x128xf32>
    %22 = vector.shape_cast %21 : vector<16x128xf32> to vector<1x16x128xf32>
    %c1_i32 = arith.constant 1 : i32
    %23 = arith.cmpi slt, %arg1, %c1_i32 : i32
    %24 = vector.extract_strided_slice %16 {offsets = [1, 0, 0], sizes = [1, 16, 128], strides = [1, 1, 1]} : vector<2x16x128xf32> to vector<1x16x128xf32>
    %25 = vector.shape_cast %24 : vector<1x16x128xf32> to vector<16x128xf32>
    %cst_13 = arith.constant 0.000000e+00 : f32
    %26 = vector.broadcast %cst_13 : f32 to vector<16x128xf32>
    %27 = arith.select %23, %25, %26 : vector<16x128xf32>
    %28 = vector.shape_cast %27 : vector<16x128xf32> to vector<1x16x128xf32>
    %29 = tpu.concatenate %22, %14, %28 in 0 : vector<1x16x128xf32>, vector<8x16x128xf32>, vector<1x16x128xf32> -> vector<10x16x128xf32>
    %cst_14 = arith.constant 0.000000e+00 : f32
    %30 = vector.broadcast %cst_14 : f32 to vector<10x1x128xf32>
    %31 = vector.extract_strided_slice %29 {offsets = [0, 0, 0], sizes = [10, 15, 128], strides = [1, 1, 1]} : vector<10x16x128xf32> to vector<10x15x128xf32>
    %32 = tpu.concatenate %30, %31 in 1 : vector<10x1x128xf32>, vector<10x15x128xf32> -> vector<10x16x128xf32>
    %33 = vector.extract_strided_slice %29 {offsets = [0, 1, 0], sizes = [10, 15, 128], strides = [1, 1, 1]} : vector<10x16x128xf32> to vector<10x15x128xf32>
    %34 = tpu.concatenate %33, %30 in 1 : vector<10x15x128xf32>, vector<10x1x128xf32> -> vector<10x16x128xf32>
    %35 = tpu.concatenate %32, %29, %34 in 2 : vector<10x16x128xf32>, vector<10x16x128xf32>, vector<10x16x128xf32> -> vector<10x16x384xf32>
    %36 = arith.truncf %35 : vector<10x16x384xf32> to vector<10x16x384xbf16>
    %c0_15 = arith.constant 0 : index
    %c0_16 = arith.constant 0 : index
    %c0_17 = arith.constant 0 : index
    %37 = vector.load %arg11[%c0_15, %c0_16, %c0_17] : memref<10x16x384xbf16, #tpu.memory_space<vmem>>, vector<10x16x384xbf16>
    tpu.vector_store %arg11[%c0_15, %c0_16, %c0_17], %36 {strides = array<i32>} : memref<10x16x384xbf16, #tpu.memory_space<vmem>>, vector<10x16x384xbf16>,
    %c0_18 = arith.constant 0 : index
    %c0_19 = arith.constant 0 : index
    %38 = vector.load %arg7[%c0_18, %c0_19] : memref<1x128xf32, #tpu.memory_space<vmem>>, vector<1x128xf32>
    %c0_20 = arith.constant 0 : index
    %c0_21 = arith.constant 0 : index
    %c0_22 = arith.constant 0 : index
    %39 = vector.load %arg11[%c0_20, %c0_21, %c0_22] : memref<10x16x384xbf16, #tpu.memory_space<vmem>>, vector<8x16x384xbf16>
    %40 = vector.shape_cast %39 : vector<8x16x384xbf16> to vector<128x384xbf16>
    %c0_23 = arith.constant 0 : index
    %c0_24 = arith.constant 0 : index
    %c0_25 = arith.constant 0 : index
    %41 = vector.load %arg6[%c0_23, %c0_24, %c0_25] : memref<3x384x128xbf16, #tpu.memory_space<vmem>>, vector<1x384x128xbf16>
    %42 = vector.shape_cast %41 : vector<1x384x128xbf16> to vector<384x128xbf16>
    %cst_26 = arith.constant dense<0.000000e+00> : vector<128x128xf32>
    %43 = tpu.matmul %40, %42, %cst_26 {dimension_numbers = #tpu.dot_dimension_numbers<[1], [0], [0], [1], [0, 0, 1, 1], [], []>} : vector<128x384xbf16>, vector<384x128xbf16>, vector<128x128xf32> -> vector<128x128xf32>
    %44 = vector.broadcast %38 : vector<1x128xf32> to vector<128x128xf32>
    %45 = arith.addf %44, %43 : vector<128x128xf32>
    %c1 = arith.constant 1 : index
    %c0_27 = arith.constant 0 : index
    %c0_28 = arith.constant 0 : index
    %46 = vector.load %arg11[%c1, %c0_27, %c0_28] : memref<10x16x384xbf16, #tpu.memory_space<vmem>>, vector<8x16x384xbf16>
    %47 = vector.shape_cast %46 : vector<8x16x384xbf16> to vector<128x384xbf16>
    %c1_29 = arith.constant 1 : index
    %c0_30 = arith.constant 0 : index
    %c0_31 = arith.constant 0 : index
    %48 = vector.load %arg6[%c1_29, %c0_30, %c0_31] : memref<3x384x128xbf16, #tpu.memory_space<vmem>>, vector<1x384x128xbf16>
    %49 = vector.shape_cast %48 : vector<1x384x128xbf16> to vector<384x128xbf16>
    %cst_32 = arith.constant dense<0.000000e+00> : vector<128x128xf32>
    %50 = tpu.matmul %47, %49, %cst_32 {dimension_numbers = #tpu.dot_dimension_numbers<[1], [0], [0], [1], [0, 0, 1, 1], [], []>} : vector<128x384xbf16>, vector<384x128xbf16>, vector<128x128xf32> -> vector<128x128xf32>
    %51 = arith.addf %45, %50 : vector<128x128xf32>
    %c2 = arith.constant 2 : index
    %c0_33 = arith.constant 0 : index
    %c0_34 = arith.constant 0 : index
    %52 = vector.load %arg11[%c2, %c0_33, %c0_34] : memref<10x16x384xbf16, #tpu.memory_space<vmem>>, vector<8x16x384xbf16>
    %53 = vector.shape_cast %52 : vector<8x16x384xbf16> to vector<128x384xbf16>
    %c2_35 = arith.constant 2 : index
    %c0_36 = arith.constant 0 : index
    %c0_37 = arith.constant 0 : index
    %54 = vector.load %arg6[%c2_35, %c0_36, %c0_37] : memref<3x384x128xbf16, #tpu.memory_space<vmem>>, vector<1x384x128xbf16>
    %55 = vector.shape_cast %54 : vector<1x384x128xbf16> to vector<384x128xbf16>
    %cst_38 = arith.constant dense<0.000000e+00> : vector<128x128xf32>
    %56 = tpu.matmul %53, %55, %cst_38 {dimension_numbers = #tpu.dot_dimension_numbers<[1], [0], [0], [1], [0, 0, 1, 1], [], []>} : vector<128x384xbf16>, vector<384x128xbf16>, vector<128x128xf32> -> vector<128x128xf32>
    %57 = arith.addf %51, %56 : vector<128x128xf32>
    %cst_39 = arith.constant 0.00999999977 : f32
    %58 = vector.broadcast %cst_39 : f32 to vector<128x128xf32>
    %59 = arith.mulf %58, %57 : vector<128x128xf32>
    %60 = arith.maximumf %57, %59 : vector<128x128xf32>
    %61 = arith.truncf %60 : vector<128x128xf32> to vector<128x128xbf16>
    %c0_40 = arith.constant 0 : index
    %c0_41 = arith.constant 0 : index
    %62 = vector.load %arg8[%c0_40, %c0_41] : memref<128x128xbf16, #tpu.memory_space<vmem>>, vector<128x128xbf16>
    %cst_42 = arith.constant dense<0.000000e+00> : vector<128x128xf32>
    %63 = tpu.matmul %61, %62, %cst_42 {dimension_numbers = #tpu.dot_dimension_numbers<[1], [0], [0], [1], [0, 0, 1, 1], [], []>} : vector<128x128xbf16>, vector<128x128xbf16>, vector<128x128xf32> -> vector<128x128xf32>
    %c0_43 = arith.constant 0 : index
    %c0_44 = arith.constant 0 : index
    %c0_45 = arith.constant 0 : index
    %c0_46 = arith.constant 0 : index
    %64 = vector.load %arg2[%c0_43, %c0_44, %c0_45, %c0_46] : memref<1x8x16x128xbf16, #tpu.memory_space<vmem>>, vector<1x8x16x128xbf16>
    %65 = vector.shape_cast %64 : vector<1x8x16x128xbf16> to vector<128x128xbf16>
    %66 = arith.extf %65 : vector<128x128xbf16> to vector<128x128xf32>
    %c0_47 = arith.constant 0 : index
    %c0_48 = arith.constant 0 : index
    %67 = vector.load %arg9[%c0_47, %c0_48] : memref<1x128xf32, #tpu.memory_space<vmem>>, vector<1x128xf32>
    %68 = vector.broadcast %67 : vector<1x128xf32> to vector<128x128xf32>
    %69 = arith.addf %63, %68 : vector<128x128xf32>
    %70 = arith.addf %69, %66 : vector<128x128xf32>
    %cst_49 = arith.constant 0.00999999977 : f32
    %71 = vector.broadcast %cst_49 : f32 to vector<128x128xf32>
    %72 = arith.mulf %71, %70 : vector<128x128xf32>
    %73 = arith.maximumf %70, %72 : vector<128x128xf32>
    %74 = vector.shape_cast %73 : vector<128x128xf32> to vector<1x8x16x128xf32>
    %c0_50 = arith.constant 0 : index
    %c0_51 = arith.constant 0 : index
    %c0_52 = arith.constant 0 : index
    %c0_53 = arith.constant 0 : index
    %75 = vector.load %arg10[%c0_50, %c0_51, %c0_52, %c0_53] : memref<1x8x16x128xf32, #tpu.memory_space<vmem>>, vector<1x8x16x128xf32>
    tpu.vector_store %arg10[%c0_50, %c0_51, %c0_52, %c0_53], %74 {strides = array<i32>} : memref<1x8x16x128xf32, #tpu.memory_space<vmem>>, vector<1x8x16x128xf32>,
    return
  }
  func.func @transform_0(%arg0: i32, %arg1: i32) -> (i32, i32, i32, i32) {
    %c0_i32 = arith.constant 0 : i32
    %c0_i32_0 = arith.constant 0 : i32
    %c0_i32_1 = arith.constant 0 : i32
    return %arg0, %arg1, %c0_i32, %c0_i32_0 : i32, i32, i32, i32
  }
  func.func @transform_1(%arg0: i32, %arg1: i32) -> (i32, i32, i32, i32) {
    %c2_i32 = arith.constant 2 : i32
    %0 = arith.muli %arg0, %c2_i32 : i32
    %1 = arith.addi %0, %arg1 : i32
    %c0_i32 = arith.constant 0 : i32
    %c0_i32_0 = arith.constant 0 : i32
    %c0_i32_1 = arith.constant 0 : i32
    %c0_i32_2 = arith.constant 0 : i32
    return %1, %c0_i32, %c0_i32_0, %c0_i32_1 : i32, i32, i32, i32
  }
  func.func @transform_2(%arg0: i32, %arg1: i32) -> (i32, i32) {
    %c0_i32 = arith.constant 0 : i32
    %c0_i32_0 = arith.constant 0 : i32
    %c0_i32_1 = arith.constant 0 : i32
    return %c0_i32, %c0_i32_0 : i32, i32
  }
  func.func @transform_3(%arg0: i32, %arg1: i32) -> (i32, i32) {
    %c0_i32 = arith.constant 0 : i32
    %c0_i32_0 = arith.constant 0 : i32
    %c0_i32_1 = arith.constant 0 : i32
    return %c0_i32, %c0_i32_0 : i32, i32
  }
  func.func @transform_4(%arg0: i32, %arg1: i32) -> (i32, i32, i32) {
    %c0_i32 = arith.constant 0 : i32
    %c0_i32_0 = arith.constant 0 : i32
    %c0_i32_1 = arith.constant 0 : i32
    %c0_i32_2 = arith.constant 0 : i32
    return %c0_i32, %c0_i32_0, %c0_i32_1 : i32, i32, i32
  }
  func.func @transform_5(%arg0: i32, %arg1: i32) -> (i32, i32) {
    %c0_i32 = arith.constant 0 : i32
    %c0_i32_0 = arith.constant 0 : i32
    %c0_i32_1 = arith.constant 0 : i32
    return %c0_i32, %c0_i32_0 : i32, i32
  }
  func.func @transform_6(%arg0: i32, %arg1: i32) -> (i32, i32) {
    %c0_i32 = arith.constant 0 : i32
    %c0_i32_0 = arith.constant 0 : i32
    %c0_i32_1 = arith.constant 0 : i32
    return %c0_i32, %c0_i32_0 : i32, i32
  }
  func.func @transform_7(%arg0: i32, %arg1: i32) -> (i32, i32) {
    %c0_i32 = arith.constant 0 : i32
    %c0_i32_0 = arith.constant 0 : i32
    %c0_i32_1 = arith.constant 0 : i32
    return %c0_i32, %c0_i32_0 : i32, i32
  }
  func.func @transform_8(%arg0: i32, %arg1: i32) -> (i32, i32, i32, i32) {
    %c0_i32 = arith.constant 0 : i32
    %c0_i32_0 = arith.constant 0 : i32
    %c0_i32_1 = arith.constant 0 : i32
    return %arg0, %arg1, %c0_i32, %c0_i32_0 : i32, i32, i32, i32
  }
}

</mosaic_0001>

<llo_original>
// kernel: _lambda_.1
$region0: #{_lambda_.1}
  #allocation0 [shape = 'u32[]', space=smem, size = 0x4, offset = 0x4, fixed_abs, tag = 'smem constant byte address 0x4 - core index']
  #allocation1 [shape = 'u32[144,128]{1,0:T(1,128)}', space=vmem, size = 0x12000, scoped, tag = 'internal scratch']
  #allocation2 [shape = 'bf16[10,16,384]{2,1,0:T(8,128)(2,1)}', space=vmem, size = 0x1e000, scoped, tag = 'scratch operand']
  %s0 = inlined_call_operand.vmem [shape: bf16[2,16,16,128], index: 0, kind: input, shape index: {}]
  %s1 = inlined_call_operand.vmem [shape: bf16[4,2,16,128], index: 1, kind: input, shape index: {}]
  %s2 = inlined_call_operand.vmem [shape: bf16[128,128], index: 2, kind: input, shape index: {}]
  %s3 = inlined_call_operand.vmem [shape: f32[1,128], index: 3, kind: input, shape index: {}]
  %s4 = inlined_call_operand.vmem [shape: bf16[3,384,128], index: 4, kind: input, shape index: {}]
  %s5 = inlined_call_operand.vmem [shape: f32[1,128], index: 5, kind: input, shape index: {}]
  %s6 = inlined_call_operand.vmem [shape: bf16[128,128], index: 6, kind: input, shape index: {}]
  %s7 = inlined_call_operand.vmem [shape: f32[1,128], index: 7, kind: input, shape index: {}]
  %s8 = inlined_call_operand.vmem [shape: f32[2,16,16,128], index: 8, kind: output, shape index: {}]
  %s9 = sld [smem:[#allocation0]]
  $region65: #{_lambda_.1} parent=0
    _
  %s11 = ssub.s32 1, %s9
  %s12 = scalar_select 0, %s11, %s9
  loop: start=0, step=1, limit=6
  $region2: #{_lambda_.1} parent=0 // loop_pre_header
    _
  $region3: #{_lambda_.1} parent=0 // loop_header
    %s14 = sphi 0, %s18
    %p15 = scmp.ge.s32.totalorder %s14, 6
    %s21 = sphi 0, %s33
    %s22 = sphi 0, %s29
    %s23 = sphi 0, %s21
    %s24 = sphi 0, %s22
    %s25 = sphi 0, %s23
    %s26 = sphi 0, %s24
    %s38 = sphi 0, %s40
    %s41 = sphi 0, %s38
    %s42 = sphi 0, %s41
    %s58 = sphi 0, %s42
    %s68 = sphi 0, %s70
    %s71 = sphi 0, %s68
    %s72 = sphi 0, %s71
    %s88 = sphi 0, %s72
    %s92 = sphi 0, %s92
    %s94 = sphi 0, %s92
    %s95 = sphi 0, %s94
    %s109 = sphi 0, %s95
    %s113 = sphi 0, %s113
    %s115 = sphi 0, %s113
    %s116 = sphi 0, %s115
    %s130 = sphi 0, %s116
    %s134 = sphi 0, %s134
    %s136 = sphi 0, %s134
    %s137 = sphi 0, %s136
    %s151 = sphi 0, %s137
    %s155 = sphi 0, %s155
    %s157 = sphi 0, %s155
    %s158 = sphi 0, %s157
    %s172 = sphi 0, %s158
    %s176 = sphi 0, %s176
    %s178 = sphi 0, %s176
    %s179 = sphi 0, %s178
    %s193 = sphi 0, %s179
    %s197 = sphi 0, %s197
    %s199 = sphi 0, %s197
    %s200 = sphi 0, %s199
    %s214 = sphi 0, %s200
    %s222 = sphi 0, %s224
    %s225 = sphi 0, %s222
    %s226 = sphi 0, %s225
    %s242 = sphi 0, %s226
  $region4: #{_lambda_.1} parent=0 // loop_header_branch
    %17 = sbr.rel (%p15) target = $region8
  $region5: #{_lambda_.1} parent=0 // loop_body
    %s19 = ssub.s32 %s14, 1
    %s20 = ssub.s32 %s14, 2
    %s27 = sadd.s32 1, %s22
    %p28 = scmp.ge.s32.totalorder %s27, 2
    %s29 = scalar_select %p28, 0, %s27
    %s30 = sadd.s32 1, %s21
    %s31 = scalar_select %p28, %s30, %s21
    %p32 = scmp.ge.s32.totalorder %s31, 2
    %s33 = scalar_select %p32, 0, %s31
    %s34 = ssub.s32 %s21, %s33
    %s35 = ssub.s32 %s22, %s29
    %s36 = sor.u32 %s34, %s35
    %p37 = scmp.eq.s32.totalorder %s36, 0
    %s39 = sadd.s32 %s38, 1
    %s40 = scalar_select %p37, %s38, %s39
    %p43 = pneg %p37
    %p44 = scmp.eq.s32.totalorder %s14, 3
    %p45 = por %p43, %p44
    %p46 = scmp.ne.s32.totalorder %s38, %s41
    %p47 = scmp.eq.s32.totalorder %s14, 0
    %p48 = por %p46, %p47
    %p49 = scmp.ne.s32.totalorder %s38, %s41
    %p50 = scmp.eq.s32.totalorder %s19, 3
    %p51 = por %p49, %p50
    %p52 = scmp.ne.s32.totalorder %s41, %s42
    %p53 = scmp.eq.s32.totalorder %s19, 0
    %p54 = por %p52, %p53
    %p55 = scmp.ne.s32.totalorder %s41, %s42
    %p56 = scmp.eq.s32.totalorder %s20, 3
    %p57 = por %p55, %p56
    %p59 = scmp.ne.s32.totalorder %s42, %s58
    %p60 = scmp.eq.s32.totalorder %s20, 0
    %p61 = por %p59, %p60
    %s62 = smul.u32 %s21, 2
    %s63 = sadd.s32 %s62, %s22
    %s64 = smul.u32 %s33, 2
    %s65 = sadd.s32 %s64, %s29
    %s66 = ssub.s32 %s63, %s65
    %p67 = scmp.eq.s32.totalorder %s66, 0
    %s69 = sadd.s32 %s68, 1
    %s70 = scalar_select %p67, %s68, %s69
    %p73 = pneg %p67
    %p74 = scmp.eq.s32.totalorder %s14, 3
    %p75 = por %p73, %p74
    %p76 = scmp.ne.s32.totalorder %s68, %s71
    %p77 = scmp.eq.s32.totalorder %s14, 0
    %p78 = por %p76, %p77
    %p79 = scmp.ne.s32.totalorder %s68, %s71
    %p80 = scmp.eq.s32.totalorder %s19, 3
    %p81 = por %p79, %p80
    %p82 = scmp.ne.s32.totalorder %s71, %s72
    %p83 = scmp.eq.s32.totalorder %s19, 0
    %p84 = por %p82, %p83
    %p85 = scmp.ne.s32.totalorder %s71, %s72
    %p86 = scmp.eq.s32.totalorder %s20, 3
    %p87 = por %p85, %p86
    %p89 = scmp.ne.s32.totalorder %s72, %s88
    %p90 = scmp.eq.s32.totalorder %s20, 0
    %p91 = por %p89, %p90
    %s93 = sadd.s32 %s92, 1
    %p96 = scmp.eq.s32.totalorder %s14, 3
    %p97 = scmp.ne.s32.totalorder %s92, %s94
    %p98 = scmp.eq.s32.totalorder %s14, 0
    %p99 = por %p97, %p98
    %p100 = scmp.ne.s32.totalorder %s92, %s94
    %p101 = scmp.eq.s32.totalorder %s19, 3
    %p102 = por %p100, %p101
    %p103 = scmp.ne.s32.totalorder %s94, %s95
    %p104 = scmp.eq.s32.totalorder %s19, 0
    %p105 = por %p103, %p104
    %p106 = scmp.ne.s32.totalorder %s94, %s95
    %p107 = scmp.eq.s32.totalorder %s20, 3
    %p108 = por %p106, %p107
    %p110 = scmp.ne.s32.totalorder %s95, %s109
    %p111 = scmp.eq.s32.totalorder %s20, 0
    %p112 = por %p110, %p111
    %s114 = sadd.s32 %s113, 1
    %p117 = scmp.eq.s32.totalorder %s14, 3
    %p118 = scmp.ne.s32.totalorder %s113, %s115
    %p119 = scmp.eq.s32.totalorder %s14, 0
    %p120 = por %p118, %p119
    %p121 = scmp.ne.s32.totalorder %s113, %s115
    %p122 = scmp.eq.s32.totalorder %s19, 3
    %p123 = por %p121, %p122
    %p124 = scmp.ne.s32.totalorder %s115, %s116
    %p125 = scmp.eq.s32.totalorder %s19, 0
    %p126 = por %p124, %p125
    %p127 = scmp.ne.s32.totalorder %s115, %s116
    %p128 = scmp.eq.s32.totalorder %s20, 3
    %p129 = por %p127, %p128
    %p131 = scmp.ne.s32.totalorder %s116, %s130
    %p132 = scmp.eq.s32.totalorder %s20, 0
    %p133 = por %p131, %p132
    %s135 = sadd.s32 %s134, 1
    %p138 = scmp.eq.s32.totalorder %s14, 3
    %p139 = scmp.ne.s32.totalorder %s134, %s136
    %p140 = scmp.eq.s32.totalorder %s14, 0
    %p141 = por %p139, %p140
    %p142 = scmp.ne.s32.totalorder %s134, %s136
    %p143 = scmp.eq.s32.totalorder %s19, 3
    %p144 = por %p142, %p143
    %p145 = scmp.ne.s32.totalorder %s136, %s137
    %p146 = scmp.eq.s32.totalorder %s19, 0
    %p147 = por %p145, %p146
    %p148 = scmp.ne.s32.totalorder %s136, %s137
    %p149 = scmp.eq.s32.totalorder %s20, 3
    %p150 = por %p148, %p149
    %p152 = scmp.ne.s32.totalorder %s137, %s151
    %p153 = scmp.eq.s32.totalorder %s20, 0
    %p154 = por %p152, %p153
    %s156 = sadd.s32 %s155, 1
    %p159 = scmp.eq.s32.totalorder %s14, 3
    %p160 = scmp.ne.s32.totalorder %s155, %s157
    %p161 = scmp.eq.s32.totalorder %s14, 0
    %p162 = por %p160, %p161
    %p163 = scmp.ne.s32.totalorder %s155, %s157
    %p164 = scmp.eq.s32.totalorder %s19, 3
    %p165 = por %p163, %p164
    %p166 = scmp.ne.s32.totalorder %s157, %s158
    %p167 = scmp.eq.s32.totalorder %s19, 0
    %p168 = por %p166, %p167
    %p169 = scmp.ne.s32.totalorder %s157, %s158
    %p170 = scmp.eq.s32.totalorder %s20, 3
    %p171 = por %p169, %p170
    %p173 = scmp.ne.s32.totalorder %s158, %s172
    %p174 = scmp.eq.s32.totalorder %s20, 0
    %p175 = por %p173, %p174
    %s177 = sadd.s32 %s176, 1
    %p180 = scmp.eq.s32.totalorder %s14, 3
    %p181 = scmp.ne.s32.totalorder %s176, %s178
    %p182 = scmp.eq.s32.totalorder %s14, 0
    %p183 = por %p181, %p182
    %p184 = scmp.ne.s32.totalorder %s176, %s178
    %p185 = scmp.eq.s32.totalorder %s19, 3
    %p186 = por %p184, %p185
    %p187 = scmp.ne.s32.totalorder %s178, %s179
    %p188 = scmp.eq.s32.totalorder %s19, 0
    %p189 = por %p187, %p188
    %p190 = scmp.ne.s32.totalorder %s178, %s179
    %p191 = scmp.eq.s32.totalorder %s20, 3
    %p192 = por %p190, %p191
    %p194 = scmp.ne.s32.totalorder %s179, %s193
    %p195 = scmp.eq.s32.totalorder %s20, 0
    %p196 = por %p194, %p195
    %s198 = sadd.s32 %s197, 1
    %p201 = scmp.eq.s32.totalorder %s14, 3
    %p202 = scmp.ne.s32.totalorder %s197, %s199
    %p203 = scmp.eq.s32.totalorder %s14, 0
    %p204 = por %p202, %p203
    %p205 = scmp.ne.s32.totalorder %s197, %s199
    %p206 = scmp.eq.s32.totalorder %s19, 3
    %p207 = por %p205, %p206
    %p208 = scmp.ne.s32.totalorder %s199, %s200
    %p209 = scmp.eq.s32.totalorder %s19, 0
    %p210 = por %p208, %p209
    %p211 = scmp.ne.s32.totalorder %s199, %s200
    %p212 = scmp.eq.s32.totalorder %s20, 3
    %p213 = por %p211, %p212
    %p215 = scmp.ne.s32.totalorder %s200, %s214
    %p216 = scmp.eq.s32.totalorder %s20, 0
    %p217 = por %p215, %p216
    %s218 = ssub.s32 %s21, %s33
    %s219 = ssub.s32 %s22, %s29
    %s220 = sor.u32 %s218, %s219
    %p221 = scmp.eq.s32.totalorder %s220, 0
    %s223 = sadd.s32 %s222, 1
    %s224 = scalar_select %p221, %s222, %s223
    %p227 = pneg %p221
    %p228 = scmp.eq.s32.totalorder %s14, 3
    %p229 = por %p227, %p228
    %p230 = scmp.ne.s32.totalorder %s222, %s225
    %p231 = scmp.eq.s32.totalorder %s14, 0
    %p232 = por %p230, %p231
    %p233 = scmp.ne.s32.totalorder %s222, %s225
    %p234 = scmp.eq.s32.totalorder %s19, 3
    %p235 = por %p233, %p234
    %p236 = scmp.ne.s32.totalorder %s225, %s226
    %p237 = scmp.eq.s32.totalorder %s19, 0
    %p238 = por %p236, %p237
    %p239 = scmp.ne.s32.totalorder %s225, %s226
    %p240 = scmp.eq.s32.totalorder %s20, 3
    %p241 = por %p239, %p240
    %p243 = scmp.ne.s32.totalorder %s226, %s242
    %p244 = scmp.eq.s32.totalorder %s20, 0
    %p245 = por %p243, %p244
    %p246 = scmp.le.s32.totalorder 1, %s14
    %p247 = scmp.lt.s32.totalorder %s14, 5
    %p248 = pnand %p246, %p247
    %p249 = pneg %p248
    // Predicated region
    $region9: #{_lambda_.1} parent=5 // pred_check
      _
    $region10: #{_lambda_.1} parent=5 // pred_check_branch
      %251 = sbr.rel (%p248) target = $region12
    $region11: #{_lambda_.1} parent=5 // pred_region
      %s252 = ssub.s32 %s14, 1
      // Predicated region
      $region13: #{_lambda_.1} parent=11 // pred_check
        %p253 = pneg %p105
      $region14: #{_lambda_.1} parent=11 // pred_check_branch
        %255 = sbr.rel (%p253) target = $region16
      $region15: #{_lambda_.1} parent=11 // pred_region
        _
      $region16: #{_lambda_.1} parent=11 // pred_fallthru
        _
      // Predicated region
      $region17: #{_lambda_.1} parent=11 // pred_check
        %p256 = pneg %p126
      $region18: #{_lambda_.1} parent=11 // pred_check_branch
        %258 = sbr.rel (%p256) target = $region20
      $region19: #{_lambda_.1} parent=11 // pred_region
        _
      $region20: #{_lambda_.1} parent=11 // pred_fallthru
        _
      // Predicated region
      $region21: #{_lambda_.1} parent=11 // pred_check
        %p259 = pneg %p147
      $region22: #{_lambda_.1} parent=11 // pred_check_branch
        %261 = sbr.rel (%p259) target = $region24
      $region23: #{_lambda_.1} parent=11 // pred_region
        _
      $region24: #{_lambda_.1} parent=11 // pred_fallthru
        _
      // Predicated region
      $region25: #{_lambda_.1} parent=11 // pred_check
        %p262 = pneg %p168
      $region26: #{_lambda_.1} parent=11 // pred_check_branch
        %264 = sbr.rel (%p262) target = $region28
      $region27: #{_lambda_.1} parent=11 // pred_region
        _
      $region28: #{_lambda_.1} parent=11 // pred_fallthru
        _
      // Predicated region
      $region29: #{_lambda_.1} parent=11 // pred_check
        %p265 = pneg %p189
      $region30: #{_lambda_.1} parent=11 // pred_check_branch
        %267 = sbr.rel (%p265) target = $region32
      $region31: #{_lambda_.1} parent=11 // pred_region
        _
      $region32: #{_lambda_.1} parent=11 // pred_fallthru
        _
      // Predicated region
      $region33: #{_lambda_.1} parent=11 // pred_check
        %p268 = pneg %p210
      $region34: #{_lambda_.1} parent=11 // pred_check_branch
        %270 = sbr.rel (%p268) target = $region36
      $region35: #{_lambda_.1} parent=11 // pred_region
        _
      $region36: #{_lambda_.1} parent=11 // pred_fallthru
        _
    $region12: #{_lambda_.1} parent=5 // pred_fallthru
      _
    %p271 = scmp.lt.s32.totalorder %s14, 4
    // Predicated region
    $region37: #{_lambda_.1} parent=5 // pred_check
      %p272 = pneg %p271
    $region38: #{_lambda_.1} parent=5 // pred_check_branch
      %274 = sbr.rel (%p272) target = $region40
    $region39: #{_lambda_.1} parent=5 // pred_region
      // Predicated region
      $region41: #{_lambda_.1} parent=39 // pred_check
        %p275 = pneg %p48
      $region42: #{_lambda_.1} parent=39 // pred_check_branch
        %277 = sbr.rel (%p275) target = $region44
      $region43: #{_lambda_.1} parent=39 // pred_region
        %s278 = smul.u32 8, %s22
        %p279 = scmp.lt.s32.totalorder %s21, 1
        %s280 = scalar_select %p279, %s21, 1
        %p281 = scmp.lt.s32.totalorder %s278, 15
        %s282 = scalar_select %p281, %s278, 15
        %s283 = smul.addr %s282, 2
        %s284 = smul.addr %s280, 32
        %s285 = sadd.s32 %s283, %s284
        %s286 = smul.addr %s285, 4
        %s287 = scalar_lea.vmem %s0, %s286
        %s288 = smul.u32 8, %s22
      $region44: #{_lambda_.1} parent=39 // pred_fallthru
        _
      // Predicated region
      $region45: #{_lambda_.1} parent=39 // pred_check
        %p289 = pneg %p78
      $region46: #{_lambda_.1} parent=39 // pred_check_branch
        %291 = sbr.rel (%p289) target = $region48
      $region47: #{_lambda_.1} parent=39 // pred_region
        %s292 = smul.u32 %s21, 2
        %s293 = sadd.s32 %s292, %s22
        %p294 = scmp.lt.s32.totalorder %s293, 3
        %s295 = scalar_select %p294, %s293, 3
        %s296 = smul.addr %s295, 4
        %s297 = smul.addr %s296, 4
        %s298 = scalar_lea.vmem %s1, %s297
        %s299 = smul.u32 %s21, 2
        %s300 = sadd.s32 %s299, %s22
      $region48: #{_lambda_.1} parent=39 // pred_fallthru
        _
    $region40: #{_lambda_.1} parent=5 // pred_fallthru
      _
    %p301 = scmp.le.s32.totalorder 1, %s14
    %p302 = scmp.lt.s32.totalorder %s14, 5
    %p303 = pnand %p301, %p302
    %p304 = pneg %p303
    // Predicated region
    $region49: #{_lambda_.1} parent=5 // pred_check
      _
    $region50: #{_lambda_.1} parent=5 // pred_check_branch
      %306 = sbr.rel (%p303) target = $region52
    $region51: #{_lambda_.1} parent=5 // pred_region
      %s307 = ssub.s32 %s14, 1
      %s308 = smul.u32 8, %s24
      %p309 = scmp.lt.s32.totalorder %s23, 1
      %s310 = scalar_select %p309, %s23, 1
      %p311 = scmp.lt.s32.totalorder %s308, 15
      %s312 = scalar_select %p311, %s308, 15
      %s313 = smul.addr %s312, 2
      %s314 = smul.addr %s310, 32
      %s315 = sadd.s32 %s313, %s314
      %s316 = smul.addr %s315, 4
      %s317 = scalar_lea.vmem %s0, %s316
      %p318 = pneg %p54
      %p319 = pneg %p51
      %s320 = smul.u32 %s23, 2
      %s321 = sadd.s32 %s320, %s24
      %p322 = scmp.lt.s32.totalorder %s321, 3
      %s323 = scalar_select %p322, %s321, 3
      %s324 = smul.addr %s323, 4
      %s325 = smul.addr %s324, 4
      %s326 = scalar_lea.vmem %s1, %s325
      %p327 = pneg %p84
      %p328 = pneg %p81
      %p329 = pneg %p105
      %p330 = pneg %p102
      %p331 = pneg %p126
      %p332 = pneg %p123
      %p333 = pneg %p147
      %p334 = pneg %p144
      %p335 = pneg %p168
      %p336 = pneg %p165
      %p337 = pneg %p189
      %p338 = pneg %p186
      %p339 = pneg %p210
      %p340 = pneg %p207
      %p341 = pneg %p238
      %p342 = pneg %p235
      %s343 = smul.u32 8, %s24
      %p344 = scmp.lt.s32.totalorder %s23, 1
      %s345 = scalar_select %p344, %s23, 1
      %p346 = scmp.lt.s32.totalorder %s343, 15
      %s347 = scalar_select %p346, %s343, 15
      %s348 = smul.addr %s347, 2
      %s349 = smul.addr %s345, 32
      %s350 = sadd.s32 %s348, %s349
      %s351 = smul.addr %s350, 8
      %s352 = scalar_lea.vmem %s8, %s351
      %s353 = smul.u32 8, %s24
      %p354 = scmp.lt.s32.totalorder %s23, 1
      %s355 = scalar_select %p354, %s23, 1
      %p356 = scmp.lt.s32.totalorder %s353, 15
      %s357 = scalar_select %p356, %s353, 15
      %s358 = smul.addr %s357, 2
      %s359 = smul.addr %s355, 32
      %s360 = sadd.s32 %s358, %s359
      %s361 = smul.addr %s360, 4
      %s362 = scalar_lea.vmem %s0, %s361
      %s363 = smul.u32 8, %s24
      %s364 = smul.u32 %s23, 2
      %s365 = sadd.s32 %s364, %s24
      %p366 = scmp.lt.s32.totalorder %s365, 3
      %s367 = scalar_select %p366, %s365, 3
      %s368 = smul.addr %s367, 4
      %s369 = smul.addr %s368, 4
      %s370 = scalar_lea.vmem %s1, %s369
      %s371 = smul.u32 %s23, 2
      %s372 = sadd.s32 %s371, %s24
      %s373 = smul.u32 8, %s24
      %p374 = scmp.lt.s32.totalorder %s23, 1
      %s375 = scalar_select %p374, %s23, 1
      %p376 = scmp.lt.s32.totalorder %s373, 15
      %s377 = scalar_select %p376, %s373, 15
      %s378 = smul.addr %s377, 2
      %s379 = smul.addr %s375, 32
      %s380 = sadd.s32 %s378, %s379
      %s381 = smul.addr %s380, 8
      %s382 = scalar_lea.vmem %s8, %s381
      %s383 = smul.u32 8, %s24
      %v385 = vld [vmem:[%s362] sm:$0xf]
      %v386 = vld [vmem:[%s362 + $0x4] sm:$0xf]
      %v387 = vld [vmem:[%s362 + $0x8] sm:$0xf]
      %v388 = vld [vmem:[%s362 + $0xc] sm:$0xf]
      %v389 = vld [vmem:[%s362 + $0x10] sm:$0xf]
      %v390 = vld [vmem:[%s362 + $0x14] sm:$0xf]
      %v391 = vld [vmem:[%s362 + $0x18] sm:$0xf]
      %v392 = vld [vmem:[%s362 + $0x1c] sm:$0xf]
      %v393 = vld [vmem:[%s362 + $0x20] sm:$0xf]
      %v394 = vld [vmem:[%s362 + $0x24] sm:$0xf]
      %v395 = vld [vmem:[%s362 + $0x28] sm:$0xf]
      %v396 = vld [vmem:[%s362 + $0x2c] sm:$0xf]
      %v397 = vld [vmem:[%s362 + $0x30] sm:$0xf]
      %v398 = vld [vmem:[%s362 + $0x34] sm:$0xf]
      %v399 = vld [vmem:[%s362 + $0x38] sm:$0xf]
      %v400 = vld [vmem:[%s362 + $0x3c] sm:$0xf]
      %v401 = vld [vmem:[%s370] sm:$0xf]
      %v402 = vld [vmem:[%s370 + $0x4] sm:$0xf]
      %v403 = vld [vmem:[%s370 + $0x8] sm:$0xf]
      %v404 = vld [vmem:[%s370 + $0xc] sm:$0xf]
      %v421 = vunpack.c.l.b16 %v385
      %v422 = vunpack.c.l.b16 %v386
      %v423 = vunpack.c.l.b16 %v387
      %v424 = vunpack.c.l.b16 %v388
      %v425 = vunpack.c.l.b16 %v389
      %v426 = vunpack.c.l.b16 %v390
      %v427 = vunpack.c.l.b16 %v391
      %v428 = vunpack.c.l.b16 %v392
      %v429 = vunpack.c.l.b16 %v393
      %v430 = vunpack.c.l.b16 %v394
      %v431 = vunpack.c.l.b16 %v395
      %v432 = vunpack.c.l.b16 %v396
      %v433 = vunpack.c.l.b16 %v397
      %v434 = vunpack.c.l.b16 %v398
      %v435 = vunpack.c.l.b16 %v399
      %v436 = vunpack.c.l.b16 %v400
      %v437 = vpack.c.b16 %v422, %v421
      %v438 = vpack.c.b16 %v424, %v423
      %v439 = vpack.c.b16 %v426, %v425
      %v440 = vpack.c.b16 %v428, %v427
      %v441 = vpack.c.b16 %v430, %v429
      %v442 = vpack.c.b16 %v432, %v431
      %v443 = vpack.c.b16 %v434, %v433
      %v444 = vpack.c.b16 %v436, %v435
      %v457 = vunpack.c.l.b16 %v401
      %v458 = vunpack.c.l.b16 %v402
      %v459 = vunpack.c.l.b16 %v403
      %v460 = vunpack.c.l.b16 %v404
      %v461 = vpack.c.b16 %v458, %v457
      %v462 = vpack.c.b16 %v460, %v459
      %v465 = vld [vmem:[%s2] sm:$0xf]
      %v466 = vld [vmem:[%s2 + $0x4] sm:$0xf]
      %v467 = vld [vmem:[%s2 + $0x8] sm:$0xf]
      %v468 = vld [vmem:[%s2 + $0xc] sm:$0xf]
      %v469 = vld [vmem:[%s2 + $0x10] sm:$0xf]
      %v470 = vld [vmem:[%s2 + $0x14] sm:$0xf]
      %v471 = vld [vmem:[%s2 + $0x18] sm:$0xf]
      %v472 = vld [vmem:[%s2 + $0x1c] sm:$0xf]
      %v473 = vld [vmem:[%s2 + $0x20] sm:$0xf]
      %v474 = vld [vmem:[%s2 + $0x24] sm:$0xf]
      %v475 = vld [vmem:[%s2 + $0x28] sm:$0xf]
      %v476 = vld [vmem:[%s2 + $0x2c] sm:$0xf]
      %v477 = vld [vmem:[%s2 + $0x30] sm:$0xf]
      %v478 = vld [vmem:[%s2 + $0x34] sm:$0xf]
      %v479 = vld [vmem:[%s2 + $0x38] sm:$0xf]
      %v480 = vld [vmem:[%s2 + $0x3c] sm:$0xf]
      %v481 = vld [vmem:[%s3] sm:$0x1]
      %v483 = vlaneseq
      %v484 = vshrl.u32 %v483, 7
      %v485 = vsub.s32 0, %v484
      %v486 = vrot.slane %v481, %v485
      %v504 = vunpack.c.l.b16 %v465
      %v505 = vunpack.c.l.b16 %v466
      %v506 = vunpack.c.l.b16 %v467
      %v507 = vunpack.c.l.b16 %v468
      %v508 = vunpack.c.l.b16 %v469
      %v509 = vunpack.c.l.b16 %v470
      %v510 = vunpack.c.l.b16 %v471
      %v511 = vunpack.c.l.b16 %v472
      %v512 = vunpack.c.l.b16 %v473
      %v513 = vunpack.c.l.b16 %v474
      %v514 = vunpack.c.l.b16 %v475
      %v515 = vunpack.c.l.b16 %v476
      %v516 = vunpack.c.l.b16 %v477
      %v517 = vunpack.c.l.b16 %v478
      %v518 = vunpack.c.l.b16 %v479
      %v519 = vunpack.c.l.b16 %v480
      %v520 = vpack.c.b16 %v505, %v504
      %v521 = vpack.c.b16 %v507, %v506
      %v522 = vpack.c.b16 %v509, %v508
      %v523 = vpack.c.b16 %v511, %v510
      %v524 = vpack.c.b16 %v513, %v512
      %v525 = vpack.c.b16 %v515, %v514
      %v526 = vpack.c.b16 %v517, %v516
      %v527 = vpack.c.b16 %v519, %v518
      %536 = vmatprep.subr.bf16.mxu0 0
      %537 = vmatpush1.bf16.msra.mxu0 %v527
      %538 = vmatprep.subr.bf16.mxu0 0
      %539 = vmatpush1.bf16.msra.mxu0 %v526
      %540 = vmatprep.subr.bf16.mxu0 0
      %541 = vmatpush1.bf16.msra.mxu0 %v525
      %542 = vmatprep.subr.bf16.mxu0 0
      %543 = vmatpush1.bf16.msra.mxu0 %v524
      %544 = vmatprep.subr.bf16.mxu0 0
      %545 = vmatpush1.bf16.msra.mxu0 %v523
      %546 = vmatprep.subr.bf16.mxu0 0
      %547 = vmatpush1.bf16.msra.mxu0 %v522
      %548 = vmatprep.subr.bf16.mxu0 0
      %549 = vmatpush1.bf16.msra.mxu0 %v521
      %550 = vmatprep.subr.bf16.mxu0 0
      %551 = vmatpush1.bf16.msra.mxu0 %v520
      %552 = vmatprep.subr.bf16.mxu0 0
      %553 = vmatpush2.bf16.msra.mxu0 0
      %554 = vmatprep.subr.bf16.mxu0 0
      %555 = vmatpush2.bf16.msra.mxu0 0
      %556 = vmatprep.subr.bf16.mxu0 0
      %557 = vmatpush2.bf16.msra.mxu0 0
      %558 = vmatprep.subr.bf16.mxu0 0
      %559 = vmatpush2.bf16.msra.mxu0 0
      %560 = vmatprep.subr.bf16.mxu0 0
      %561 = vmatpush2.bf16.msra.mxu0 0
      %562 = vmatprep.subr.bf16.mxu0 0
      %563 = vmatpush2.bf16.msra.mxu0 0
      %564 = vmatprep.subr.bf16.mxu0 0
      %565 = vmatpush2.bf16.msra.mxu0 0
      %566 = vmatprep.subr.bf16.mxu0 0
      %567 = vmatpush2.bf16.msra.mxu0 0
      %568 = vmatprep.mubr.bf16.mxu0 0
      %569 = vmatmul.mubr.bf16.gmra.mxu0 %v437
      %v570 = vpop.f32.mrf.mxu0
      %v571 = vadd.f32 %v486, %v570
      %v572 = vpop.f32.mrf.mxu0
      %v573 = vpop.f32.mrf.mxu0
      %v574 = vadd.f32 %v486, %v573
      %v575 = vpop.f32.mrf.mxu0
      %576 = vmatprep.mubr.bf16.mxu0 0
      %577 = vmatmul.mubr.bf16.gmra.mxu0 %v438
      %v578 = vpop.f32.mrf.mxu0
      %v579 = vadd.f32 %v486, %v578
      %v580 = vpop.f32.mrf.mxu0
      %v581 = vpop.f32.mrf.mxu0
      %v582 = vadd.f32 %v486, %v581
      %v583 = vpop.f32.mrf.mxu0
      %584 = vmatprep.mubr.bf16.mxu0 0
      %585 = vmatmul.mubr.bf16.gmra.mxu0 %v439
      %v586 = vpop.f32.mrf.mxu0
      %v587 = vadd.f32 %v486, %v586
      %v588 = vpop.f32.mrf.mxu0
      %v589 = vpop.f32.mrf.mxu0
      %v590 = vadd.f32 %v486, %v589
      %v591 = vpop.f32.mrf.mxu0
      %592 = vmatprep.mubr.bf16.mxu0 0
      %593 = vmatmul.mubr.bf16.gmra.mxu0 %v440
      %v594 = vpop.f32.mrf.mxu0
      %v595 = vadd.f32 %v486, %v594
      %v596 = vpop.f32.mrf.mxu0
      %v597 = vpop.f32.mrf.mxu0
      %v598 = vadd.f32 %v486, %v597
      %v599 = vpop.f32.mrf.mxu0
      %600 = vmatprep.mubr.bf16.mxu0 0
      %601 = vmatmul.mubr.bf16.gmra.mxu0 %v441
      %v602 = vpop.f32.mrf.mxu0
      %v603 = vadd.f32 %v486, %v602
      %v604 = vpop.f32.mrf.mxu0
      %v605 = vpop.f32.mrf.mxu0
      %v606 = vadd.f32 %v486, %v605
      %v607 = vpop.f32.mrf.mxu0
      %608 = vmatprep.mubr.bf16.mxu0 0
      %609 = vmatmul.mubr.bf16.gmra.mxu0 %v442
      %v610 = vpop.f32.mrf.mxu0
      %v611 = vadd.f32 %v486, %v610
      %v612 = vpop.f32.mrf.mxu0
      %v613 = vpop.f32.mrf.mxu0
      %v614 = vadd.f32 %v486, %v613
      %v615 = vpop.f32.mrf.mxu0
      %616 = vmatprep.mubr.bf16.mxu0 0
      %617 = vmatmul.mubr.bf16.gmra.mxu0 %v443
      %v618 = vpop.f32.mrf.mxu0
      %v619 = vadd.f32 %v486, %v618
      %v620 = vpop.f32.mrf.mxu0
      %v621 = vpop.f32.mrf.mxu0
      %v622 = vadd.f32 %v486, %v621
      %v623 = vpop.f32.mrf.mxu0
      %624 = vmatprep.mubr.bf16.mxu0 0
      %625 = vmatmul.mubr.bf16.gmra.mxu0 %v444
      %v626 = vpop.f32.mrf.mxu0
      %v627 = vadd.f32 %v486, %v626
      %v628 = vpop.f32.mrf.mxu0
      %v629 = vpop.f32.mrf.mxu0
      %v630 = vadd.f32 %v486, %v629
      %v631 = vpop.f32.mrf.mxu0
      %632 = vmatprep.mubr.bf16.mxu0 0
      %633 = vmatmul.mubr.bf16.gmra.mxu0 %v461
      %v634 = vpop.f32.mrf.mxu0
      %v635 = vadd.f32 %v486, %v634
      %v636 = vpop.f32.mrf.mxu0
      %v637 = vpop.f32.mrf.mxu0
      %v638 = vadd.f32 %v486, %v637
      %v639 = vpop.f32.mrf.mxu0
      %640 = vmatprep.mubr.bf16.mxu0 0
      %641 = vmatmul.mubr.bf16.gmra.mxu0 %v462
      %v642 = vpop.f32.mrf.mxu0
      %v643 = vadd.f32 %v486, %v642
      %v644 = vpop.f32.mrf.mxu0
      %v645 = vpop.f32.mrf.mxu0
      %v646 = vadd.f32 %v486, %v645
      %v647 = vpop.f32.mrf.mxu0
      %648 = vdwg.mxu0
      %v649 = vmul.f32 %v571, 0.01
      %v650 = vmul.f32 %v574, 0.01
      %v651 = vmul.f32 %v579, 0.01
      %v652 = vmul.f32 %v582, 0.01
      %v653 = vmul.f32 %v587, 0.01
      %v654 = vmul.f32 %v590, 0.01
      %v655 = vmul.f32 %v595, 0.01
      %v656 = vmul.f32 %v598, 0.01
      %v657 = vmul.f32 %v603, 0.01
      %v658 = vmul.f32 %v606, 0.01
      %v659 = vmul.f32 %v611, 0.01
      %v660 = vmul.f32 %v614, 0.01
      %v661 = vmul.f32 %v619, 0.01
      %v662 = vmul.f32 %v622, 0.01
      %v663 = vmul.f32 %v627, 0.01
      %v664 = vmul.f32 %v630, 0.01
      %v665 = vmul.f32 %v635, 0.01
      %v666 = vmul.f32 %v638, 0.01
      %v667 = vmul.f32 %v643, 0.01
      %v668 = vmul.f32 %v646, 0.01
      %v669 = vmax.f32 %v571, %v649
      %v670 = vmax.f32 %v574, %v650
      %v671 = vmax.f32 %v579, %v651
      %v672 = vmax.f32 %v582, %v652
      %v673 = vmax.f32 %v587, %v653
      %v674 = vmax.f32 %v590, %v654
      %v675 = vmax.f32 %v595, %v655
      %v676 = vmax.f32 %v598, %v656
      %v677 = vmax.f32 %v603, %v657
      %v678 = vmax.f32 %v606, %v658
      %v679 = vmax.f32 %v611, %v659
      %v680 = vmax.f32 %v614, %v660
      %v681 = vmax.f32 %v619, %v661
      %v682 = vmax.f32 %v622, %v662
      %v683 = vmax.f32 %v627, %v663
      %v684 = vmax.f32 %v630, %v664
      %v685 = vmax.f32 %v635, %v665
      %v686 = vmax.f32 %v638, %v666
      %v687 = vmax.f32 %v643, %v667
      %v688 = vmax.f32 %v646, %v668
      %p689 = scmp.gt.s32.totalorder %s24, 0
      %s690 = scalar_select %p689, 1, 0
      %v691 = vstv %s690
      %vm692 = vcmp.eq.s32.totalorder %v691, 1
      %v693 = vsel %vm692, %v685, 0.0
      %v694 = vsel %vm692, %v686, 0.0
      %p695 = scmp.lt.s32.totalorder %s24, 1
      %s696 = scalar_select %p695, 1, 0
      %v697 = vstv %s696
      %vm698 = vcmp.eq.s32.totalorder %v697, 1
      %v699 = vsel %vm698, %v687, 0.0
      %v700 = vsel %vm698, %v688, 0.0
      %vm721 = vcmask 1040384
      %v722 = vrot.slane %v693, 7
      %v723 = vrot.slane %v694, 7
      %v724 = vsel %vm721, %v722, %v723
      %v725 = vrot.slane %v669, 7
      %v726 = vrot.slane %v670, 7
      %v727 = vsel %vm721, %v725, %v726
      %v728 = vrot.slane %v671, 7
      %v729 = vrot.slane %v672, 7
      %v730 = vsel %vm721, %v728, %v729
      %v731 = vrot.slane %v673, 7
      %v732 = vrot.slane %v674, 7
      %v733 = vsel %vm721, %v731, %v732
      %v734 = vrot.slane %v675, 7
      %v735 = vrot.slane %v676, 7
      %v736 = vsel %vm721, %v734, %v735
      %v737 = vrot.slane %v677, 7
      %v738 = vrot.slane %v678, 7
      %v739 = vsel %vm721, %v737, %v738
      %v740 = vrot.slane %v679, 7
      %v741 = vrot.slane %v680, 7
      %v742 = vsel %vm721, %v740, %v741
      %v743 = vrot.slane %v681, 7
      %v744 = vrot.slane %v682, 7
      %v745 = vsel %vm721, %v743, %v744
      %v746 = vrot.slane %v683, 7
      %v747 = vrot.slane %v684, 7
      %v748 = vsel %vm721, %v746, %v747
      %v749 = vrot.slane %v699, 7
      %v750 = vrot.slane %v700, 7
      %v751 = vsel %vm721, %v749, %v750
      %v772 = vsel %vm721, 0.0, %v722
      %v773 = vsel %vm721, 0.0, %v725
      %v774 = vsel %vm721, 0.0, %v728
      %v775 = vsel %vm721, 0.0, %v731
      %v776 = vsel %vm721, 0.0, %v734
      %v777 = vsel %vm721, 0.0, %v737
      %v778 = vsel %vm721, 0.0, %v740
      %v779 = vsel %vm721, 0.0, %v743
      %v780 = vsel %vm721, 0.0, %v746
      %v781 = vsel %vm721, 0.0, %v749
      %vm782 = vcmask 1046528
      %v783 = vrot.slane %v693, 1
      %v784 = vrot.slane %v694, 1
      %v785 = vsel %vm782, %v783, %v784
      %v786 = vrot.slane %v669, 1
      %v787 = vrot.slane %v670, 1
      %v788 = vsel %vm782, %v786, %v787
      %v789 = vrot.slane %v671, 1
      %v790 = vrot.slane %v672, 1
      %v791 = vsel %vm782, %v789, %v790
      %v792 = vrot.slane %v673, 1
      %v793 = vrot.slane %v674, 1
      %v794 = vsel %vm782, %v792, %v793
      %v795 = vrot.slane %v675, 1
      %v796 = vrot.slane %v676, 1
      %v797 = vsel %vm782, %v795, %v796
      %v798 = vrot.slane %v677, 1
      %v799 = vrot.slane %v678, 1
      %v800 = vsel %vm782, %v798, %v799
      %v801 = vrot.slane %v679, 1
      %v802 = vrot.slane %v680, 1
      %v803 = vsel %vm782, %v801, %v802
      %v804 = vrot.slane %v681, 1
      %v805 = vrot.slane %v682, 1
      %v806 = vsel %vm782, %v804, %v805
      %v807 = vrot.slane %v683, 1
      %v808 = vrot.slane %v684, 1
      %v809 = vsel %vm782, %v807, %v808
      %v810 = vrot.slane %v699, 1
      %v811 = vrot.slane %v700, 1
      %v812 = vsel %vm782, %v810, %v811
      %v833 = vsel %vm782, %v784, 0.0
      %v834 = vsel %vm782, %v787, 0.0
      %v835 = vsel %vm782, %v790, 0.0
      %v836 = vsel %vm782, %v793, 0.0
      %v837 = vsel %vm782, %v796, 0.0
      %v838 = vsel %vm782, %v799, 0.0
      %v839 = vsel %vm782, %v802, 0.0
      %v840 = vsel %vm782, %v805, 0.0
      %v841 = vsel %vm782, %v808, 0.0
      %v842 = vsel %vm782, %v811, 0.0
      %v843 = vpack.c.bf16 %v724, %v772
      %v844 = vpack.c.bf16 %v694, %v693
      %v845 = vpack.c.bf16 %v833, %v785
      %v846 = vpack.c.bf16 %v727, %v773
      %v847 = vpack.c.bf16 %v670, %v669
      %v848 = vpack.c.bf16 %v834, %v788
      %v849 = vpack.c.bf16 %v730, %v774
      %v850 = vpack.c.bf16 %v672, %v671
      %v851 = vpack.c.bf16 %v835, %v791
      %v852 = vpack.c.bf16 %v733, %v775
      %v853 = vpack.c.bf16 %v674, %v673
      %v854 = vpack.c.bf16 %v836, %v794
      %v855 = vpack.c.bf16 %v736, %v776
      %v856 = vpack.c.bf16 %v676, %v675
      %v857 = vpack.c.bf16 %v837, %v797
      %v858 = vpack.c.bf16 %v739, %v777
      %v859 = vpack.c.bf16 %v678, %v677
      %v860 = vpack.c.bf16 %v838, %v800
      %v861 = vpack.c.bf16 %v742, %v778
      %v862 = vpack.c.bf16 %v680, %v679
      %v863 = vpack.c.bf16 %v839, %v803
      %v864 = vpack.c.bf16 %v745, %v779
      %v865 = vpack.c.bf16 %v682, %v681
      %v866 = vpack.c.bf16 %v840, %v806
      %v867 = vpack.c.bf16 %v748, %v780
      %v868 = vpack.c.bf16 %v684, %v683
      %v869 = vpack.c.bf16 %v841, %v809
      %v870 = vpack.c.bf16 %v751, %v781
      %v871 = vpack.c.bf16 %v700, %v699
      %v872 = vpack.c.bf16 %v842, %v812
      %v903 = vunpack.c.l.b16 %v843
      %v904 = vunpack.c.l.b16 %v844
      %v905 = vunpack.c.l.b16 %v845
      %v906 = vunpack.c.h.b16 %v843
      %v907 = vunpack.c.h.b16 %v844
      %v908 = vunpack.c.h.b16 %v845
      %v909 = vunpack.c.l.b16 %v846
      %v910 = vunpack.c.l.b16 %v847
      %v911 = vunpack.c.l.b16 %v848
      %v912 = vunpack.c.h.b16 %v846
      %v913 = vunpack.c.h.b16 %v847
      %v914 = vunpack.c.h.b16 %v848
      %v915 = vunpack.c.l.b16 %v849
      %v916 = vunpack.c.l.b16 %v850
      %v917 = vunpack.c.l.b16 %v851
      %v918 = vunpack.c.h.b16 %v849
      %v919 = vunpack.c.h.b16 %v850
      %v920 = vunpack.c.h.b16 %v851
      %v921 = vunpack.c.l.b16 %v852
      %v922 = vunpack.c.l.b16 %v853
      %v923 = vunpack.c.l.b16 %v854
      %v924 = vunpack.c.h.b16 %v852
      %v925 = vunpack.c.h.b16 %v853
      %v926 = vunpack.c.h.b16 %v854
      %v927 = vunpack.c.l.b16 %v855
      %v928 = vunpack.c.l.b16 %v856
      %v929 = vunpack.c.l.b16 %v857
      %v930 = vunpack.c.h.b16 %v855
      %v931 = vunpack.c.h.b16 %v856
      %v932 = vunpack.c.h.b16 %v857
      %v933 = vunpack.c.l.b16 %v858
      %v934 = vunpack.c.l.b16 %v859
      %v935 = vunpack.c.l.b16 %v860
      %v936 = vunpack.c.h.b16 %v858
      %v937 = vunpack.c.h.b16 %v859
      %v938 = vunpack.c.h.b16 %v860
      %v939 = vunpack.c.l.b16 %v861
      %v940 = vunpack.c.l.b16 %v862
      %v941 = vunpack.c.l.b16 %v863
      %v942 = vunpack.c.h.b16 %v861
      %v943 = vunpack.c.h.b16 %v862
      %v944 = vunpack.c.h.b16 %v863
      %v945 = vunpack.c.l.b16 %v864
      %v946 = vunpack.c.l.b16 %v865
      %v947 = vunpack.c.l.b16 %v866
      %v948 = vunpack.c.h.b16 %v864
      %v949 = vunpack.c.h.b16 %v865
      %v950 = vunpack.c.h.b16 %v866
      %v951 = vunpack.c.l.b16 %v867
      %v952 = vunpack.c.l.b16 %v868
      %v953 = vunpack.c.l.b16 %v869
      %v954 = vunpack.c.h.b16 %v867
      %v955 = vunpack.c.h.b16 %v868
      %v956 = vunpack.c.h.b16 %v869
      %v957 = vunpack.c.l.b16 %v870
      %v958 = vunpack.c.l.b16 %v871
      %v959 = vunpack.c.l.b16 %v872
      %v960 = vunpack.c.h.b16 %v870
      %v961 = vunpack.c.h.b16 %v871
      %v962 = vunpack.c.h.b16 %v872
      %v963 = vpack.c.b16 %v904, %v903
      %v964 = vpack.c.b16 %v905, %v905
      %v965 = vpack.c.b16 %v907, %v906
      %v966 = vpack.c.b16 %v908, %v908
      %v967 = vpack.c.b16 %v910, %v909
      %v968 = vpack.c.b16 %v911, %v911
      %v969 = vpack.c.b16 %v913, %v912
      %v970 = vpack.c.b16 %v914, %v914
      %v971 = vpack.c.b16 %v916, %v915
      %v972 = vpack.c.b16 %v917, %v917
      %v973 = vpack.c.b16 %v919, %v918
      %v974 = vpack.c.b16 %v920, %v920
      %v975 = vpack.c.b16 %v922, %v921
      %v976 = vpack.c.b16 %v923, %v923
      %v977 = vpack.c.b16 %v925, %v924
      %v978 = vpack.c.b16 %v926, %v926
      %v979 = vpack.c.b16 %v928, %v927
      %v980 = vpack.c.b16 %v929, %v929
      %v981 = vpack.c.b16 %v931, %v930
      %v982 = vpack.c.b16 %v932, %v932
      %v983 = vpack.c.b16 %v934, %v933
      %v984 = vpack.c.b16 %v935, %v935
      %v985 = vpack.c.b16 %v937, %v936
      %v986 = vpack.c.b16 %v938, %v938
      %v987 = vpack.c.b16 %v940, %v939
      %v988 = vpack.c.b16 %v941, %v941
      %v989 = vpack.c.b16 %v943, %v942
      %v990 = vpack.c.b16 %v944, %v944
      %v991 = vpack.c.b16 %v946, %v945
      %v992 = vpack.c.b16 %v947, %v947
      %v993 = vpack.c.b16 %v949, %v948
      %v994 = vpack.c.b16 %v950, %v950
      %v995 = vpack.c.b16 %v952, %v951
      %v996 = vpack.c.b16 %v953, %v953
      %v997 = vpack.c.b16 %v955, %v954
      %v998 = vpack.c.b16 %v956, %v956
      %v999 = vpack.c.b16 %v958, %v957
      %v1000 = vpack.c.b16 %v959, %v959
      %v1001 = vpack.c.b16 %v961, %v960
      %v1002 = vpack.c.b16 %v962, %v962
      %1043 = vst [vmem:[#allocation2] sm:$0xff] %v963
      %1044 = vst [vmem:[#allocation2 + $0x8] sm:$0xf] %v964
      %1045 = vst [vmem:[#allocation2 + $0xc] sm:$0xff] %v965
      %1046 = vst [vmem:[#allocation2 + $0x14] sm:$0xf] %v966
      %1047 = vst [vmem:[#allocation2 + $0x18] sm:$0xff] %v967
      %1048 = vst [vmem:[#allocation2 + $0x20] sm:$0xf] %v968
      %1049 = vst [vmem:[#allocation2 + $0x24] sm:$0xff] %v969
      %1050 = vst [vmem:[#allocation2 + $0x2c] sm:$0xf] %v970
      %1051 = vst [vmem:[#allocation2 + $0x30] sm:$0xff] %v971
      %1052 = vst [vmem:[#allocation2 + $0x38] sm:$0xf] %v972
      %1053 = vst [vmem:[#allocation2 + $0x3c] sm:$0xff] %v973
      %1054 = vst [vmem:[#allocation2 + $0x44] sm:$0xf] %v974
      %1055 = vst [vmem:[#allocation2 + $0x48] sm:$0xff] %v975
      %1056 = vst [vmem:[#allocation2 + $0x50] sm:$0xf] %v976
      %1057 = vst [vmem:[#allocation2 + $0x54] sm:$0xff] %v977
      %1058 = vst [vmem:[#allocation2 + $0x5c] sm:$0xf] %v978
      %1059 = vst [vmem:[#allocation2 + $0x60] sm:$0xff] %v979
      %1060 = vst [vmem:[#allocation2 + $0x68] sm:$0xf] %v980
      %1061 = vst [vmem:[#allocation2 + $0x6c] sm:$0xff] %v981
      %1062 = vst [vmem:[#allocation2 + $0x74] sm:$0xf] %v982
      %1063 = vst [vmem:[#allocation2 + $0x78] sm:$0xff] %v983
      %1064 = vst [vmem:[#allocation2 + $0x80] sm:$0xf] %v984
      %1065 = vst [vmem:[#allocation2 + $0x84] sm:$0xff] %v985
      %1066 = vst [vmem:[#allocation2 + $0x8c] sm:$0xf] %v986
      %1067 = vst [vmem:[#allocation2 + $0x90] sm:$0xff] %v987
      %1068 = vst [vmem:[#allocation2 + $0x98] sm:$0xf] %v988
      %1069 = vst [vmem:[#allocation2 + $0x9c] sm:$0xff] %v989
      %1070 = vst [vmem:[#allocation2 + $0xa4] sm:$0xf] %v990
      %1071 = vst [vmem:[#allocation2 + $0xa8] sm:$0xff] %v991
      %1072 = vst [vmem:[#allocation2 + $0xb0] sm:$0xf] %v992
      %1073 = vst [vmem:[#allocation2 + $0xb4] sm:$0xff] %v993
      %1074 = vst [vmem:[#allocation2 + $0xbc] sm:$0xf] %v994
      %1075 = vst [vmem:[#allocation2 + $0xc0] sm:$0xff] %v995
      %1076 = vst [vmem:[#allocation2 + $0xc8] sm:$0xf] %v996
      %1077 = vst [vmem:[#allocation2 + $0xcc] sm:$0xff] %v997
      %1078 = vst [vmem:[#allocation2 + $0xd4] sm:$0xf] %v998
      %1079 = vst [vmem:[#allocation2 + $0xd8] sm:$0xff] %v999
      %1080 = vst [vmem:[#allocation2 + $0xe0] sm:$0xf] %v1000
      %1081 = vst [vmem:[#allocation2 + $0xe4] sm:$0xff] %v1001
      %1082 = vst [vmem:[#allocation2 + $0xec] sm:$0xf] %v1002
      %v1083 = vld [vmem:[%s5] sm:$0x1]
      %v1084 = vld [vmem:[#allocation2] sm:$0xff]
      %v1085 = vld [vmem:[#allocation2 + $0x8] sm:$0xf]
      %v1086 = vld [vmem:[#allocation2 + $0xc] sm:$0xff]
      %v1087 = vld [vmem:[#allocation2 + $0x14] sm:$0xf]
      %v1088 = vld [vmem:[#allocation2 + $0x18] sm:$0xff]
      %v1089 = vld [vmem:[#allocation2 + $0x20] sm:$0xf]
      %v1090 = vld [vmem:[#allocation2 + $0x24] sm:$0xff]
      %v1091 = vld [vmem:[#allocation2 + $0x2c] sm:$0xf]
      %v1092 = vld [vmem:[#allocation2 + $0x30] sm:$0xff]
      %v1093 = vld [vmem:[#allocation2 + $0x38] sm:$0xf]
      %v1094 = vld [vmem:[#allocation2 + $0x3c] sm:$0xff]
      %v1095 = vld [vmem:[#allocation2 + $0x44] sm:$0xf]
      %v1096 = vld [vmem:[#allocation2 + $0x48] sm:$0xff]
      %v1097 = vld [vmem:[#allocation2 + $0x50] sm:$0xf]
      %v1098 = vld [vmem:[#allocation2 + $0x54] sm:$0xff]
      %v1099 = vld [vmem:[#allocation2 + $0x5c] sm:$0xf]
      %v1100 = vld [vmem:[#allocation2 + $0x60] sm:$0xff]
      %v1101 = vld [vmem:[#allocation2 + $0x68] sm:$0xf]
      %v1102 = vld [vmem:[#allocation2 + $0x6c] sm:$0xff]
      %v1103 = vld [vmem:[#allocation2 + $0x74] sm:$0xf]
      %v1104 = vld [vmem:[#allocation2 + $0x78] sm:$0xff]
      %v1105 = vld [vmem:[#allocation2 + $0x80] sm:$0xf]
      %v1106 = vld [vmem:[#allocation2 + $0x84] sm:$0xff]
      %v1107 = vld [vmem:[#allocation2 + $0x8c] sm:$0xf]
      %v1108 = vld [vmem:[#allocation2 + $0x90] sm:$0xff]
      %v1109 = vld [vmem:[#allocation2 + $0x98] sm:$0xf]
      %v1110 = vld [vmem:[#allocation2 + $0x9c] sm:$0xff]
      %v1111 = vld [vmem:[#allocation2 + $0xa4] sm:$0xf]
      %v1112 = vld [vmem:[#allocation2 + $0xa8] sm:$0xff]
      %v1113 = vld [vmem:[#allocation2 + $0xb0] sm:$0xf]
      %v1114 = vld [vmem:[#allocation2 + $0xb4] sm:$0xff]
      %v1115 = vld [vmem:[#allocation2 + $0xbc] sm:$0xf]
      %v1116 = vld [vmem:[%s4] sm:$0xf]
      %v1117 = vld [vmem:[%s4 + $0x4] sm:$0xf]
      %v1118 = vld [vmem:[%s4 + $0x8] sm:$0xf]
      %v1119 = vld [vmem:[%s4 + $0xc] sm:$0xf]
      %v1120 = vld [vmem:[%s4 + $0x10] sm:$0xf]
      %v1121 = vld [vmem:[%s4 + $0x14] sm:$0xf]
      %v1122 = vld [vmem:[%s4 + $0x18] sm:$0xf]
      %v1123 = vld [vmem:[%s4 + $0x1c] sm:$0xf]
      %v1124 = vld [vmem:[%s4 + $0x20] sm:$0xf]
      %v1125 = vld [vmem:[%s4 + $0x24] sm:$0xf]
      %v1126 = vld [vmem:[%s4 + $0x28] sm:$0xf]
      %v1127 = vld [vmem:[%s4 + $0x2c] sm:$0xf]
      %v1128 = vld [vmem:[%s4 + $0x30] sm:$0xf]
      %v1129 = vld [vmem:[%s4 + $0x34] sm:$0xf]
      %v1130 = vld [vmem:[%s4 + $0x38] sm:$0xf]
      %v1131 = vld [vmem:[%s4 + $0x3c] sm:$0xf]
      %v1132 = vld [vmem:[%s4 + $0x40] sm:$0xf]
      %v1133 = vld [vmem:[%s4 + $0x44] sm:$0xf]
      %v1134 = vld [vmem:[%s4 + $0x48] sm:$0xf]
      %v1135 = vld [vmem:[%s4 + $0x4c] sm:$0xf]
      %v1136 = vld [vmem:[%s4 + $0x50] sm:$0xf]
      %v1137 = vld [vmem:[%s4 + $0x54] sm:$0xf]
      %v1138 = vld [vmem:[%s4 + $0x58] sm:$0xf]
      %v1139 = vld [vmem:[%s4 + $0x5c] sm:$0xf]
      %v1140 = vld [vmem:[%s4 + $0x60] sm:$0xf]
      %v1141 = vld [vmem:[%s4 + $0x64] sm:$0xf]
      %v1142 = vld [vmem:[%s4 + $0x68] sm:$0xf]
      %v1143 = vld [vmem:[%s4 + $0x6c] sm:$0xf]
      %v1144 = vld [vmem:[%s4 + $0x70] sm:$0xf]
      %v1145 = vld [vmem:[%s4 + $0x74] sm:$0xf]
      %v1146 = vld [vmem:[%s4 + $0x78] sm:$0xf]
      %v1147 = vld [vmem:[%s4 + $0x7c] sm:$0xf]
      %v1148 = vld [vmem:[%s4 + $0x80] sm:$0xf]
      %v1149 = vld [vmem:[%s4 + $0x84] sm:$0xf]
      %v1150 = vld [vmem:[%s4 + $0x88] sm:$0xf]
      %v1151 = vld [vmem:[%s4 + $0x8c] sm:$0xf]
      %v1152 = vld [vmem:[%s4 + $0x90] sm:$0xf]
      %v1153 = vld [vmem:[%s4 + $0x94] sm:$0xf]
      %v1154 = vld [vmem:[%s4 + $0x98] sm:$0xf]
      %v1155 = vld [vmem:[%s4 + $0x9c] sm:$0xf]
      %v1156 = vld [vmem:[%s4 + $0xa0] sm:$0xf]
      %v1157 = vld [vmem:[%s4 + $0xa4] sm:$0xf]
      %v1158 = vld [vmem:[%s4 + $0xa8] sm:$0xf]
      %v1159 = vld [vmem:[%s4 + $0xac] sm:$0xf]
      %v1160 = vld [vmem:[%s4 + $0xb0] sm:$0xf]
      %v1161 = vld [vmem:[%s4 + $0xb4] sm:$0xf]
      %v1162 = vld [vmem:[%s4 + $0xb8] sm:$0xf]
      %v1163 = vld [vmem:[%s4 + $0xbc] sm:$0xf]
      %v1196 = vunpack.c.l.b16 %v1084
      %v1197 = vunpack.c.h.b16 %v1084
      %v1198 = vunpack.c.l.b16 %v1085
      %v1199 = vunpack.c.l.b16 %v1086
      %v1200 = vunpack.c.h.b16 %v1086
      %v1201 = vunpack.c.l.b16 %v1087
      %v1202 = vunpack.c.l.b16 %v1088
      %v1203 = vunpack.c.h.b16 %v1088
      %v1204 = vunpack.c.l.b16 %v1089
      %v1205 = vunpack.c.l.b16 %v1090
      %v1206 = vunpack.c.h.b16 %v1090
      %v1207 = vunpack.c.l.b16 %v1091
      %v1208 = vunpack.c.l.b16 %v1092
      %v1209 = vunpack.c.h.b16 %v1092
      %v1210 = vunpack.c.l.b16 %v1093
      %v1211 = vunpack.c.l.b16 %v1094
      %v1212 = vunpack.c.h.b16 %v1094
      %v1213 = vunpack.c.l.b16 %v1095
      %v1214 = vunpack.c.l.b16 %v1096
      %v1215 = vunpack.c.h.b16 %v1096
      %v1216 = vunpack.c.l.b16 %v1097
      %v1217 = vunpack.c.l.b16 %v1098
      %v1218 = vunpack.c.h.b16 %v1098
      %v1219 = vunpack.c.l.b16 %v1099
      %v1220 = vunpack.c.l.b16 %v1100
      %v1221 = vunpack.c.h.b16 %v1100
      %v1222 = vunpack.c.l.b16 %v1101
      %v1223 = vunpack.c.l.b16 %v1102
      %v1224 = vunpack.c.h.b16 %v1102
      %v1225 = vunpack.c.l.b16 %v1103
      %v1226 = vunpack.c.l.b16 %v1104
      %v1227 = vunpack.c.h.b16 %v1104
      %v1228 = vunpack.c.l.b16 %v1105
      %v1229 = vunpack.c.l.b16 %v1106
      %v1230 = vunpack.c.h.b16 %v1106
      %v1231 = vunpack.c.l.b16 %v1107
      %v1232 = vunpack.c.l.b16 %v1108
      %v1233 = vunpack.c.h.b16 %v1108
      %v1234 = vunpack.c.l.b16 %v1109
      %v1235 = vunpack.c.l.b16 %v1110
      %v1236 = vunpack.c.h.b16 %v1110
      %v1237 = vunpack.c.l.b16 %v1111
      %v1238 = vunpack.c.l.b16 %v1112
      %v1239 = vunpack.c.h.b16 %v1112
      %v1240 = vunpack.c.l.b16 %v1113
      %v1241 = vunpack.c.l.b16 %v1114
      %v1242 = vunpack.c.h.b16 %v1114
      %v1243 = vunpack.c.l.b16 %v1115
      %v1244 = vpack.c.b16 %v1199, %v1196
      %v1245 = vpack.c.b16 %v1200, %v1197
      %v1246 = vpack.c.b16 %v1201, %v1198
      %v1247 = vpack.c.b16 %v1205, %v1202
      %v1248 = vpack.c.b16 %v1206, %v1203
      %v1249 = vpack.c.b16 %v1207, %v1204
      %v1250 = vpack.c.b16 %v1211, %v1208
      %v1251 = vpack.c.b16 %v1212, %v1209
      %v1252 = vpack.c.b16 %v1213, %v1210
      %v1253 = vpack.c.b16 %v1217, %v1214
      %v1254 = vpack.c.b16 %v1218, %v1215
      %v1255 = vpack.c.b16 %v1219, %v1216
      %v1256 = vpack.c.b16 %v1223, %v1220
      %v1257 = vpack.c.b16 %v1224, %v1221
      %v1258 = vpack.c.b16 %v1225, %v1222
      %v1259 = vpack.c.b16 %v1229, %v1226
      %v1260 = vpack.c.b16 %v1230, %v1227
      %v1261 = vpack.c.b16 %v1231, %v1228
      %v1262 = vpack.c.b16 %v1235, %v1232
      %v1263 = vpack.c.b16 %v1236, %v1233
      %v1264 = vpack.c.b16 %v1237, %v1234
      %v1265 = vpack.c.b16 %v1241, %v1238
      %v1266 = vpack.c.b16 %v1242, %v1239
      %v1267 = vpack.c.b16 %v1243, %v1240
      %v1340 = vunpack.c.l.b16 %v1116
      %v1341 = vunpack.c.l.b16 %v1117
      %v1342 = vunpack.c.l.b16 %v1118
      %v1343 = vunpack.c.l.b16 %v1119
      %v1344 = vunpack.c.l.b16 %v1120
      %v1345 = vunpack.c.l.b16 %v1121
      %v1346 = vunpack.c.l.b16 %v1122
      %v1347 = vunpack.c.l.b16 %v1123
      %v1348 = vunpack.c.l.b16 %v1124
      %v1349 = vunpack.c.l.b16 %v1125
      %v1350 = vunpack.c.l.b16 %v1126
      %v1351 = vunpack.c.l.b16 %v1127
      %v1352 = vunpack.c.l.b16 %v1128
      %v1353 = vunpack.c.l.b16 %v1129
      %v1354 = vunpack.c.l.b16 %v1130
      %v1355 = vunpack.c.l.b16 %v1131
      %v1356 = vunpack.c.l.b16 %v1132
      %v1357 = vunpack.c.l.b16 %v1133
      %v1358 = vunpack.c.l.b16 %v1134
      %v1359 = vunpack.c.l.b16 %v1135
      %v1360 = vunpack.c.l.b16 %v1136
      %v1361 = vunpack.c.l.b16 %v1137
      %v1362 = vunpack.c.l.b16 %v1138
      %v1363 = vunpack.c.l.b16 %v1139
      %v1364 = vunpack.c.l.b16 %v1140
      %v1365 = vunpack.c.l.b16 %v1141
      %v1366 = vunpack.c.l.b16 %v1142
      %v1367 = vunpack.c.l.b16 %v1143
      %v1368 = vunpack.c.l.b16 %v1144
      %v1369 = vunpack.c.l.b16 %v1145
      %v1370 = vunpack.c.l.b16 %v1146
      %v1371 = vunpack.c.l.b16 %v1147
      %v1372 = vunpack.c.l.b16 %v1148
      %v1373 = vunpack.c.l.b16 %v1149
      %v1374 = vunpack.c.l.b16 %v1150
      %v1375 = vunpack.c.l.b16 %v1151
      %v1376 = vunpack.c.l.b16 %v1152
      %v1377 = vunpack.c.l.b16 %v1153
      %v1378 = vunpack.c.l.b16 %v1154
      %v1379 = vunpack.c.l.b16 %v1155
      %v1380 = vunpack.c.l.b16 %v1156
      %v1381 = vunpack.c.l.b16 %v1157
      %v1382 = vunpack.c.l.b16 %v1158
      %v1383 = vunpack.c.l.b16 %v1159
      %v1384 = vunpack.c.l.b16 %v1160
      %v1385 = vunpack.c.l.b16 %v1161
      %v1386 = vunpack.c.l.b16 %v1162
      %v1387 = vunpack.c.l.b16 %v1163
      %v1388 = vpack.c.b16 %v1341, %v1340
      %v1389 = vpack.c.b16 %v1343, %v1342
      %v1390 = vpack.c.b16 %v1345, %v1344
      %v1391 = vpack.c.b16 %v1347, %v1346
      %v1392 = vpack.c.b16 %v1349, %v1348
      %v1393 = vpack.c.b16 %v1351, %v1350
      %v1394 = vpack.c.b16 %v1353, %v1352
      %v1395 = vpack.c.b16 %v1355, %v1354
      %v1396 = vpack.c.b16 %v1357, %v1356
      %v1397 = vpack.c.b16 %v1359, %v1358
      %v1398 = vpack.c.b16 %v1361, %v1360
      %v1399 = vpack.c.b16 %v1363, %v1362
      %v1400 = vpack.c.b16 %v1365, %v1364
      %v1401 = vpack.c.b16 %v1367, %v1366
      %v1402 = vpack.c.b16 %v1369, %v1368
      %v1403 = vpack.c.b16 %v1371, %v1370
      %v1404 = vpack.c.b16 %v1373, %v1372
      %v1405 = vpack.c.b16 %v1375, %v1374
      %v1406 = vpack.c.b16 %v1377, %v1376
      %v1407 = vpack.c.b16 %v1379, %v1378
      %v1408 = vpack.c.b16 %v1381, %v1380
      %v1409 = vpack.c.b16 %v1383, %v1382
      %v1410 = vpack.c.b16 %v1385, %v1384
      %v1411 = vpack.c.b16 %v1387, %v1386
      %1436 = vmatprep.subr.bf16.mxu0 0
      %1437 = vmatpush1.bf16.msra.mxu0 %v1395
      %1438 = vmatprep.subr.bf16.mxu0 0
      %1439 = vmatpush1.bf16.msra.mxu0 %v1394
      %1440 = vmatprep.subr.bf16.mxu0 0
      %1441 = vmatpush1.bf16.msra.mxu0 %v1393
      %1442 = vmatprep.subr.bf16.mxu0 0
      %1443 = vmatpush1.bf16.msra.mxu0 %v1392
      %1444 = vmatprep.subr.bf16.mxu0 0
      %1445 = vmatpush1.bf16.msra.mxu0 %v1391
      %1446 = vmatprep.subr.bf16.mxu0 0
      %1447 = vmatpush1.bf16.msra.mxu0 %v1390
      %1448 = vmatprep.subr.bf16.mxu0 0
      %1449 = vmatpush1.bf16.msra.mxu0 %v1389
      %1450 = vmatprep.subr.bf16.mxu0 0
      %1451 = vmatpush1.bf16.msra.mxu0 %v1388
      %1452 = vmatprep.subr.bf16.mxu0 0
      %1453 = vmatpush2.bf16.msra.mxu0 %v1403
      %1454 = vmatprep.subr.bf16.mxu0 0
      %1455 = vmatpush2.bf16.msra.mxu0 %v1402
      %1456 = vmatprep.subr.bf16.mxu0 0
      %1457 = vmatpush2.bf16.msra.mxu0 %v1401
      %1458 = vmatprep.subr.bf16.mxu0 0
      %1459 = vmatpush2.bf16.msra.mxu0 %v1400
      %1460 = vmatprep.subr.bf16.mxu0 0
      %1461 = vmatpush2.bf16.msra.mxu0 %v1399
      %1462 = vmatprep.subr.bf16.mxu0 0
      %1463 = vmatpush2.bf16.msra.mxu0 %v1398
      %1464 = vmatprep.subr.bf16.mxu0 0
      %1465 = vmatpush2.bf16.msra.mxu0 %v1397
      %1466 = vmatprep.subr.bf16.mxu0 0
      %1467 = vmatpush2.bf16.msra.mxu0 %v1396
      %1468 = vmatprep.mubr.bf16.mxu0 %v1245
      %1469 = vmatmul.mubr.bf16.gmra.mxu0 %v1244
      %v1470 = vpop.f32.mrf.mxu0
      %v1471 = vadd.f32 0.0, %v1470
      %v1472 = vpop.f32.mrf.mxu0
      %v1473 = vpop.f32.mrf.mxu0
      %v1474 = vadd.f32 0.0, %v1473
      %v1475 = vpop.f32.mrf.mxu0
      %1476 = vmatprep.mubr.bf16.mxu0 %v1248
      %1477 = vmatmul.mubr.bf16.gmra.mxu0 %v1247
      %v1478 = vpop.f32.mrf.mxu0
      %v1479 = vadd.f32 0.0, %v1478
      %v1480 = vpop.f32.mrf.mxu0
      %v1481 = vpop.f32.mrf.mxu0
      %v1482 = vadd.f32 0.0, %v1481
      %v1483 = vpop.f32.mrf.mxu0
      %1484 = vmatprep.mubr.bf16.mxu0 %v1251
      %1485 = vmatmul.mubr.bf16.gmra.mxu0 %v1250
      %v1486 = vpop.f32.mrf.mxu0
      %v1487 = vadd.f32 0.0, %v1486
      %v1488 = vpop.f32.mrf.mxu0
      %v1489 = vpop.f32.mrf.mxu0
      %v1490 = vadd.f32 0.0, %v1489
      %v1491 = vpop.f32.mrf.mxu0
      %1492 = vmatprep.mubr.bf16.mxu0 %v1254
      %1493 = vmatmul.mubr.bf16.gmra.mxu0 %v1253
      %v1494 = vpop.f32.mrf.mxu0
      %v1495 = vadd.f32 0.0, %v1494
      %v1496 = vpop.f32.mrf.mxu0
      %v1497 = vpop.f32.mrf.mxu0
      %v1498 = vadd.f32 0.0, %v1497
      %v1499 = vpop.f32.mrf.mxu0
      %1500 = vmatprep.mubr.bf16.mxu0 %v1257
      %1501 = vmatmul.mubr.bf16.gmra.mxu0 %v1256
      %v1502 = vpop.f32.mrf.mxu0
      %v1503 = vadd.f32 0.0, %v1502
      %v1504 = vpop.f32.mrf.mxu0
      %v1505 = vpop.f32.mrf.mxu0
      %v1506 = vadd.f32 0.0, %v1505
      %v1507 = vpop.f32.mrf.mxu0
      %1508 = vmatprep.mubr.bf16.mxu0 %v1260
      %1509 = vmatmul.mubr.bf16.gmra.mxu0 %v1259
      %v1510 = vpop.f32.mrf.mxu0
      %v1511 = vadd.f32 0.0, %v1510
      %v1512 = vpop.f32.mrf.mxu0
      %v1513 = vpop.f32.mrf.mxu0
      %v1514 = vadd.f32 0.0, %v1513
      %v1515 = vpop.f32.mrf.mxu0
      %1516 = vmatprep.mubr.bf16.mxu0 %v1263
      %1517 = vmatmul.mubr.bf16.gmra.mxu0 %v1262
      %v1518 = vpop.f32.mrf.mxu0
      %v1519 = vadd.f32 0.0, %v1518
      %v1520 = vpop.f32.mrf.mxu0
      %v1521 = vpop.f32.mrf.mxu0
      %v1522 = vadd.f32 0.0, %v1521
      %v1523 = vpop.f32.mrf.mxu0
      %1524 = vmatprep.mubr.bf16.mxu0 %v1266
      %1525 = vmatmul.mubr.bf16.gmra.mxu0 %v1265
      %v1526 = vpop.f32.mrf.mxu0
      %v1527 = vadd.f32 0.0, %v1526
      %v1528 = vpop.f32.mrf.mxu0
      %v1529 = vpop.f32.mrf.mxu0
      %v1530 = vadd.f32 0.0, %v1529
      %v1531 = vpop.f32.mrf.mxu0
      %1532 = vdwg.mxu0
      %1533 = vmatprep.subr.bf16.mxu0 0
      %1534 = vmatpush1.bf16.msra.mxu0 %v1411
      %1535 = vmatprep.subr.bf16.mxu0 0
      %1536 = vmatpush1.bf16.msra.mxu0 %v1410
      %1537 = vmatprep.subr.bf16.mxu0 0
      %1538 = vmatpush1.bf16.msra.mxu0 %v1409
      %1539 = vmatprep.subr.bf16.mxu0 0
      %1540 = vmatpush1.bf16.msra.mxu0 %v1408
      %1541 = vmatprep.subr.bf16.mxu0 0
      %1542 = vmatpush1.bf16.msra.mxu0 %v1407
      %1543 = vmatprep.subr.bf16.mxu0 0
      %1544 = vmatpush1.bf16.msra.mxu0 %v1406
      %1545 = vmatprep.subr.bf16.mxu0 0
      %1546 = vmatpush1.bf16.msra.mxu0 %v1405
      %1547 = vmatprep.subr.bf16.mxu0 0
      %1548 = vmatpush1.bf16.msra.mxu0 %v1404
      %1549 = vmatprep.subr.bf16.mxu0 0
      %1550 = vmatpush2.bf16.msra.mxu0 0
      %1551 = vmatprep.subr.bf16.mxu0 0
      %1552 = vmatpush2.bf16.msra.mxu0 0
      %1553 = vmatprep.subr.bf16.mxu0 0
      %1554 = vmatpush2.bf16.msra.mxu0 0
      %1555 = vmatprep.subr.bf16.mxu0 0
      %1556 = vmatpush2.bf16.msra.mxu0 0
      %1557 = vmatprep.subr.bf16.mxu0 0
      %1558 = vmatpush2.bf16.msra.mxu0 0
      %1559 = vmatprep.subr.bf16.mxu0 0
      %1560 = vmatpush2.bf16.msra.mxu0 0
      %1561 = vmatprep.subr.bf16.mxu0 0
      %1562 = vmatpush2.bf16.msra.mxu0 0
      %1563 = vmatprep.subr.bf16.mxu0 0
      %1564 = vmatpush2.bf16.msra.mxu0 0
      %1565 = vmatprep.mubr.bf16.mxu0 0
      %1566 = vmatmul.mubr.bf16.gmra.mxu0 %v1246
      %v1567 = vpop.f32.mrf.mxu0
      %v1568 = vadd.f32 %v1471, %v1567
      %v1569 = vpop.f32.mrf.mxu0
      %v1570 = vpop.f32.mrf.mxu0
      %v1571 = vadd.f32 %v1474, %v1570
      %v1572 = vpop.f32.mrf.mxu0
      %1573 = vmatprep.mubr.bf16.mxu0 0
      %1574 = vmatmul.mubr.bf16.gmra.mxu0 %v1249
      %v1575 = vpop.f32.mrf.mxu0
      %v1576 = vadd.f32 %v1479, %v1575
      %v1577 = vpop.f32.mrf.mxu0
      %v1578 = vpop.f32.mrf.mxu0
      %v1579 = vadd.f32 %v1482, %v1578
      %v1580 = vpop.f32.mrf.mxu0
      %1581 = vmatprep.mubr.bf16.mxu0 0
      %1582 = vmatmul.mubr.bf16.gmra.mxu0 %v1252
      %v1583 = vpop.f32.mrf.mxu0
      %v1584 = vadd.f32 %v1487, %v1583
      %v1585 = vpop.f32.mrf.mxu0
      %v1586 = vpop.f32.mrf.mxu0
      %v1587 = vadd.f32 %v1490, %v1586
      %v1588 = vpop.f32.mrf.mxu0
      %1589 = vmatprep.mubr.bf16.mxu0 0
      %1590 = vmatmul.mubr.bf16.gmra.mxu0 %v1255
      %v1591 = vpop.f32.mrf.mxu0
      %v1592 = vadd.f32 %v1495, %v1591
      %v1593 = vpop.f32.mrf.mxu0
      %v1594 = vpop.f32.mrf.mxu0
      %v1595 = vadd.f32 %v1498, %v1594
      %v1596 = vpop.f32.mrf.mxu0
      %1597 = vmatprep.mubr.bf16.mxu0 0
      %1598 = vmatmul.mubr.bf16.gmra.mxu0 %v1258
      %v1599 = vpop.f32.mrf.mxu0
      %v1600 = vadd.f32 %v1503, %v1599
      %v1601 = vpop.f32.mrf.mxu0
      %v1602 = vpop.f32.mrf.mxu0
      %v1603 = vadd.f32 %v1506, %v1602
      %v1604 = vpop.f32.mrf.mxu0
      %1605 = vmatprep.mubr.bf16.mxu0 0
      %1606 = vmatmul.mubr.bf16.gmra.mxu0 %v1261
      %v1607 = vpop.f32.mrf.mxu0
      %v1608 = vadd.f32 %v1511, %v1607
      %v1609 = vpop.f32.mrf.mxu0
      %v1610 = vpop.f32.mrf.mxu0
      %v1611 = vadd.f32 %v1514, %v1610
      %v1612 = vpop.f32.mrf.mxu0
      %1613 = vmatprep.mubr.bf16.mxu0 0
      %1614 = vmatmul.mubr.bf16.gmra.mxu0 %v1264
      %v1615 = vpop.f32.mrf.mxu0
      %v1616 = vadd.f32 %v1519, %v1615
      %v1617 = vpop.f32.mrf.mxu0
      %v1618 = vpop.f32.mrf.mxu0
      %v1619 = vadd.f32 %v1522, %v1618
      %v1620 = vpop.f32.mrf.mxu0
      %1621 = vmatprep.mubr.bf16.mxu0 0
      %1622 = vmatmul.mubr.bf16.gmra.mxu0 %v1267
      %v1623 = vpop.f32.mrf.mxu0
      %v1624 = vadd.f32 %v1527, %v1623
      %v1625 = vpop.f32.mrf.mxu0
      %v1626 = vpop.f32.mrf.mxu0
      %v1627 = vadd.f32 %v1530, %v1626
      %v1628 = vpop.f32.mrf.mxu0
      %1629 = vdwg.mxu0
      %v1631 = vlaneseq
      %v1632 = vshrl.u32 %v1631, 7
      %v1633 = vsub.s32 0, %v1632
      %v1634 = vrot.slane %v1083, %v1633
      %v1636 = vadd.f32 %v1634, %v1568
      %v1637 = vadd.f32 %v1634, %v1571
      %v1638 = vadd.f32 %v1634, %v1576
      %v1639 = vadd.f32 %v1634, %v1579
      %v1640 = vadd.f32 %v1634, %v1584
      %v1641 = vadd.f32 %v1634, %v1587
      %v1642 = vadd.f32 %v1634, %v1592
      %v1643 = vadd.f32 %v1634, %v1595
      %v1644 = vadd.f32 %v1634, %v1600
      %v1645 = vadd.f32 %v1634, %v1603
      %v1646 = vadd.f32 %v1634, %v1608
      %v1647 = vadd.f32 %v1634, %v1611
      %v1648 = vadd.f32 %v1634, %v1616
      %v1649 = vadd.f32 %v1634, %v1619
      %v1650 = vadd.f32 %v1634, %v1624
      %v1651 = vadd.f32 %v1634, %v1627
      %s1652 = scalar_lea.vmem [#allocation2], 24
      %v1653 = vld [vmem:[%s1652] sm:$0xff]
      %v1654 = vld [vmem:[%s1652 + $0x8] sm:$0xf]
      %v1655 = vld [vmem:[%s1652 + $0xc] sm:$0xff]
      %v1656 = vld [vmem:[%s1652 + $0x14] sm:$0xf]
      %v1657 = vld [vmem:[%s1652 + $0x18] sm:$0xff]
      %v1658 = vld [vmem:[%s1652 + $0x20] sm:$0xf]
      %v1659 = vld [vmem:[%s1652 + $0x24] sm:$0xff]
      %v1660 = vld [vmem:[%s1652 + $0x2c] sm:$0xf]
      %v1661 = vld [vmem:[%s1652 + $0x30] sm:$0xff]
      %v1662 = vld [vmem:[%s1652 + $0x38] sm:$0xf]
      %v1663 = vld [vmem:[%s1652 + $0x3c] sm:$0xff]
      %v1664 = vld [vmem:[%s1652 + $0x44] sm:$0xf]
      %v1665 = vld [vmem:[%s1652 + $0x48] sm:$0xff]
      %v1666 = vld [vmem:[%s1652 + $0x50] sm:$0xf]
      %v1667 = vld [vmem:[%s1652 + $0x54] sm:$0xff]
      %v1668 = vld [vmem:[%s1652 + $0x5c] sm:$0xf]
      %v1669 = vld [vmem:[%s1652 + $0x60] sm:$0xff]
      %v1670 = vld [vmem:[%s1652 + $0x68] sm:$0xf]
      %v1671 = vld [vmem:[%s1652 + $0x6c] sm:$0xff]
      %v1672 = vld [vmem:[%s1652 + $0x74] sm:$0xf]
      %v1673 = vld [vmem:[%s1652 + $0x78] sm:$0xff]
      %v1674 = vld [vmem:[%s1652 + $0x80] sm:$0xf]
      %v1675 = vld [vmem:[%s1652 + $0x84] sm:$0xff]
      %v1676 = vld [vmem:[%s1652 + $0x8c] sm:$0xf]
      %v1677 = vld [vmem:[%s1652 + $0x90] sm:$0xff]
      %v1678 = vld [vmem:[%s1652 + $0x98] sm:$0xf]
      %v1679 = vld [vmem:[%s1652 + $0x9c] sm:$0xff]
      %v1680 = vld [vmem:[%s1652 + $0xa4] sm:$0xf]
      %v1681 = vld [vmem:[%s1652 + $0xa8] sm:$0xff]
      %v1682 = vld [vmem:[%s1652 + $0xb0] sm:$0xf]
      %v1683 = vld [vmem:[%s1652 + $0xb4] sm:$0xff]
      %v1684 = vld [vmem:[%s1652 + $0xbc] sm:$0xf]
      %s1685 = scalar_lea.vmem %s4, 192
      %v1686 = vld [vmem:[%s1685] sm:$0xf]
      %v1687 = vld [vmem:[%s1685 + $0x4] sm:$0xf]
      %v1688 = vld [vmem:[%s1685 + $0x8] sm:$0xf]
      %v1689 = vld [vmem:[%s1685 + $0xc] sm:$0xf]
      %v1690 = vld [vmem:[%s1685 + $0x10] sm:$0xf]
      %v1691 = vld [vmem:[%s1685 + $0x14] sm:$0xf]
      %v1692 = vld [vmem:[%s1685 + $0x18] sm:$0xf]
      %v1693 = vld [vmem:[%s1685 + $0x1c] sm:$0xf]
      %v1694 = vld [vmem:[%s1685 + $0x20] sm:$0xf]
      %v1695 = vld [vmem:[%s1685 + $0x24] sm:$0xf]
      %v1696 = vld [vmem:[%s1685 + $0x28] sm:$0xf]
      %v1697 = vld [vmem:[%s1685 + $0x2c] sm:$0xf]
      %v1698 = vld [vmem:[%s1685 + $0x30] sm:$0xf]
      %v1699 = vld [vmem:[%s1685 + $0x34] sm:$0xf]
      %v1700 = vld [vmem:[%s1685 + $0x38] sm:$0xf]
      %v1701 = vld [vmem:[%s1685 + $0x3c] sm:$0xf]
      %v1702 = vld [vmem:[%s1685 + $0x40] sm:$0xf]
      %v1703 = vld [vmem:[%s1685 + $0x44] sm:$0xf]
      %v1704 = vld [vmem:[%s1685 + $0x48] sm:$0xf]
      %v1705 = vld [vmem:[%s1685 + $0x4c] sm:$0xf]
      %v1706 = vld [vmem:[%s1685 + $0x50] sm:$0xf]
      %v1707 = vld [vmem:[%s1685 + $0x54] sm:$0xf]
      %v1708 = vld [vmem:[%s1685 + $0x58] sm:$0xf]
      %v1709 = vld [vmem:[%s1685 + $0x5c] sm:$0xf]
      %v1710 = vld [vmem:[%s1685 + $0x60] sm:$0xf]
      %v1711 = vld [vmem:[%s1685 + $0x64] sm:$0xf]
      %v1712 = vld [vmem:[%s1685 + $0x68] sm:$0xf]
      %v1713 = vld [vmem:[%s1685 + $0x6c] sm:$0xf]
      %v1714 = vld [vmem:[%s1685 + $0x70] sm:$0xf]
      %v1715 = vld [vmem:[%s1685 + $0x74] sm:$0xf]
      %v1716 = vld [vmem:[%s1685 + $0x78] sm:$0xf]
      %v1717 = vld [vmem:[%s1685 + $0x7c] sm:$0xf]
      %v1718 = vld [vmem:[%s1685 + $0x80] sm:$0xf]
      %v1719 = vld [vmem:[%s1685 + $0x84] sm:$0xf]
      %v1720 = vld [vmem:[%s1685 + $0x88] sm:$0xf]
      %v1721 = vld [vmem:[%s1685 + $0x8c] sm:$0xf]
      %v1722 = vld [vmem:[%s1685 + $0x90] sm:$0xf]
      %v1723 = vld [vmem:[%s1685 + $0x94] sm:$0xf]
      %v1724 = vld [vmem:[%s1685 + $0x98] sm:$0xf]
      %v1725 = vld [vmem:[%s1685 + $0x9c] sm:$0xf]
      %v1726 = vld [vmem:[%s1685 + $0xa0] sm:$0xf]
      %v1727 = vld [vmem:[%s1685 + $0xa4] sm:$0xf]
      %v1728 = vld [vmem:[%s1685 + $0xa8] sm:$0xf]
      %v1729 = vld [vmem:[%s1685 + $0xac] sm:$0xf]
      %v1730 = vld [vmem:[%s1685 + $0xb0] sm:$0xf]
      %v1731 = vld [vmem:[%s1685 + $0xb4] sm:$0xf]
      %v1732 = vld [vmem:[%s1685 + $0xb8] sm:$0xf]
      %v1733 = vld [vmem:[%s1685 + $0xbc] sm:$0xf]
      %v1766 = vunpack.c.l.b16 %v1653
      %v1767 = vunpack.c.h.b16 %v1653
      %v1768 = vunpack.c.l.b16 %v1654
      %v1769 = vunpack.c.l.b16 %v1655
      %v1770 = vunpack.c.h.b16 %v1655
      %v1771 = vunpack.c.l.b16 %v1656
      %v1772 = vunpack.c.l.b16 %v1657
      %v1773 = vunpack.c.h.b16 %v1657
      %v1774 = vunpack.c.l.b16 %v1658
      %v1775 = vunpack.c.l.b16 %v1659
      %v1776 = vunpack.c.h.b16 %v1659
      %v1777 = vunpack.c.l.b16 %v1660
      %v1778 = vunpack.c.l.b16 %v1661
      %v1779 = vunpack.c.h.b16 %v1661
      %v1780 = vunpack.c.l.b16 %v1662
      %v1781 = vunpack.c.l.b16 %v1663
      %v1782 = vunpack.c.h.b16 %v1663
      %v1783 = vunpack.c.l.b16 %v1664
      %v1784 = vunpack.c.l.b16 %v1665
      %v1785 = vunpack.c.h.b16 %v1665
      %v1786 = vunpack.c.l.b16 %v1666
      %v1787 = vunpack.c.l.b16 %v1667
      %v1788 = vunpack.c.h.b16 %v1667
      %v1789 = vunpack.c.l.b16 %v1668
      %v1790 = vunpack.c.l.b16 %v1669
      %v1791 = vunpack.c.h.b16 %v1669
      %v1792 = vunpack.c.l.b16 %v1670
      %v1793 = vunpack.c.l.b16 %v1671
      %v1794 = vunpack.c.h.b16 %v1671
      %v1795 = vunpack.c.l.b16 %v1672
      %v1796 = vunpack.c.l.b16 %v1673
      %v1797 = vunpack.c.h.b16 %v1673
      %v1798 = vunpack.c.l.b16 %v1674
      %v1799 = vunpack.c.l.b16 %v1675
      %v1800 = vunpack.c.h.b16 %v1675
      %v1801 = vunpack.c.l.b16 %v1676
      %v1802 = vunpack.c.l.b16 %v1677
      %v1803 = vunpack.c.h.b16 %v1677
      %v1804 = vunpack.c.l.b16 %v1678
      %v1805 = vunpack.c.l.b16 %v1679
      %v1806 = vunpack.c.h.b16 %v1679
      %v1807 = vunpack.c.l.b16 %v1680
      %v1808 = vunpack.c.l.b16 %v1681
      %v1809 = vunpack.c.h.b16 %v1681
      %v1810 = vunpack.c.l.b16 %v1682
      %v1811 = vunpack.c.l.b16 %v1683
      %v1812 = vunpack.c.h.b16 %v1683
      %v1813 = vunpack.c.l.b16 %v1684
      %v1814 = vpack.c.b16 %v1769, %v1766
      %v1815 = vpack.c.b16 %v1770, %v1767
      %v1816 = vpack.c.b16 %v1771, %v1768
      %v1817 = vpack.c.b16 %v1775, %v1772
      %v1818 = vpack.c.b16 %v1776, %v1773
      %v1819 = vpack.c.b16 %v1777, %v1774
      %v1820 = vpack.c.b16 %v1781, %v1778
      %v1821 = vpack.c.b16 %v1782, %v1779
      %v1822 = vpack.c.b16 %v1783, %v1780
      %v1823 = vpack.c.b16 %v1787, %v1784
      %v1824 = vpack.c.b16 %v1788, %v1785
      %v1825 = vpack.c.b16 %v1789, %v1786
      %v1826 = vpack.c.b16 %v1793, %v1790
      %v1827 = vpack.c.b16 %v1794, %v1791
      %v1828 = vpack.c.b16 %v1795, %v1792
      %v1829 = vpack.c.b16 %v1799, %v1796
      %v1830 = vpack.c.b16 %v1800, %v1797
      %v1831 = vpack.c.b16 %v1801, %v1798
      %v1832 = vpack.c.b16 %v1805, %v1802
      %v1833 = vpack.c.b16 %v1806, %v1803
      %v1834 = vpack.c.b16 %v1807, %v1804
      %v1835 = vpack.c.b16 %v1811, %v1808
      %v1836 = vpack.c.b16 %v1812, %v1809
      %v1837 = vpack.c.b16 %v1813, %v1810
      %v1910 = vunpack.c.l.b16 %v1686
      %v1911 = vunpack.c.l.b16 %v1687
      %v1912 = vunpack.c.l.b16 %v1688
      %v1913 = vunpack.c.l.b16 %v1689
      %v1914 = vunpack.c.l.b16 %v1690
      %v1915 = vunpack.c.l.b16 %v1691
      %v1916 = vunpack.c.l.b16 %v1692
      %v1917 = vunpack.c.l.b16 %v1693
      %v1918 = vunpack.c.l.b16 %v1694
      %v1919 = vunpack.c.l.b16 %v1695
      %v1920 = vunpack.c.l.b16 %v1696
      %v1921 = vunpack.c.l.b16 %v1697
      %v1922 = vunpack.c.l.b16 %v1698
      %v1923 = vunpack.c.l.b16 %v1699
      %v1924 = vunpack.c.l.b16 %v1700
      %v1925 = vunpack.c.l.b16 %v1701
      %v1926 = vunpack.c.l.b16 %v1702
      %v1927 = vunpack.c.l.b16 %v1703
      %v1928 = vunpack.c.l.b16 %v1704
      %v1929 = vunpack.c.l.b16 %v1705
      %v1930 = vunpack.c.l.b16 %v1706
      %v1931 = vunpack.c.l.b16 %v1707
      %v1932 = vunpack.c.l.b16 %v1708
      %v1933 = vunpack.c.l.b16 %v1709
      %v1934 = vunpack.c.l.b16 %v1710
      %v1935 = vunpack.c.l.b16 %v1711
      %v1936 = vunpack.c.l.b16 %v1712
      %v1937 = vunpack.c.l.b16 %v1713
      %v1938 = vunpack.c.l.b16 %v1714
      %v1939 = vunpack.c.l.b16 %v1715
      %v1940 = vunpack.c.l.b16 %v1716
      %v1941 = vunpack.c.l.b16 %v1717
      %v1942 = vunpack.c.l.b16 %v1718
      %v1943 = vunpack.c.l.b16 %v1719
      %v1944 = vunpack.c.l.b16 %v1720
      %v1945 = vunpack.c.l.b16 %v1721
      %v1946 = vunpack.c.l.b16 %v1722
      %v1947 = vunpack.c.l.b16 %v1723
      %v1948 = vunpack.c.l.b16 %v1724
      %v1949 = vunpack.c.l.b16 %v1725
      %v1950 = vunpack.c.l.b16 %v1726
      %v1951 = vunpack.c.l.b16 %v1727
      %v1952 = vunpack.c.l.b16 %v1728
      %v1953 = vunpack.c.l.b16 %v1729
      %v1954 = vunpack.c.l.b16 %v1730
      %v1955 = vunpack.c.l.b16 %v1731
      %v1956 = vunpack.c.l.b16 %v1732
      %v1957 = vunpack.c.l.b16 %v1733
      %v1958 = vpack.c.b16 %v1911, %v1910
      %v1959 = vpack.c.b16 %v1913, %v1912
      %v1960 = vpack.c.b16 %v1915, %v1914
      %v1961 = vpack.c.b16 %v1917, %v1916
      %v1962 = vpack.c.b16 %v1919, %v1918
      %v1963 = vpack.c.b16 %v1921, %v1920
      %v1964 = vpack.c.b16 %v1923, %v1922
      %v1965 = vpack.c.b16 %v1925, %v1924
      %v1966 = vpack.c.b16 %v1927, %v1926
      %v1967 = vpack.c.b16 %v1929, %v1928
      %v1968 = vpack.c.b16 %v1931, %v1930
      %v1969 = vpack.c.b16 %v1933, %v1932
      %v1970 = vpack.c.b16 %v1935, %v1934
      %v1971 = vpack.c.b16 %v1937, %v1936
      %v1972 = vpack.c.b16 %v1939, %v1938
      %v1973 = vpack.c.b16 %v1941, %v1940
      %v1974 = vpack.c.b16 %v1943, %v1942
      %v1975 = vpack.c.b16 %v1945, %v1944
      %v1976 = vpack.c.b16 %v1947, %v1946
      %v1977 = vpack.c.b16 %v1949, %v1948
      %v1978 = vpack.c.b16 %v1951, %v1950
      %v1979 = vpack.c.b16 %v1953, %v1952
      %v1980 = vpack.c.b16 %v1955, %v1954
      %v1981 = vpack.c.b16 %v1957, %v1956
      %2006 = vmatprep.subr.bf16.mxu0 0
      %2007 = vmatpush1.bf16.msra.mxu0 %v1965
      %2008 = vmatprep.subr.bf16.mxu0 0
      %2009 = vmatpush1.bf16.msra.mxu0 %v1964
      %2010 = vmatprep.subr.bf16.mxu0 0
      %2011 = vmatpush1.bf16.msra.mxu0 %v1963
      %2012 = vmatprep.subr.bf16.mxu0 0
      %2013 = vmatpush1.bf16.msra.mxu0 %v1962
      %2014 = vmatprep.subr.bf16.mxu0 0
      %2015 = vmatpush1.bf16.msra.mxu0 %v1961
      %2016 = vmatprep.subr.bf16.mxu0 0
      %2017 = vmatpush1.bf16.msra.mxu0 %v1960
      %2018 = vmatprep.subr.bf16.mxu0 0
      %2019 = vmatpush1.bf16.msra.mxu0 %v1959
      %2020 = vmatprep.subr.bf16.mxu0 0
      %2021 = vmatpush1.bf16.msra.mxu0 %v1958
      %2022 = vmatprep.subr.bf16.mxu0 0
      %2023 = vmatpush2.bf16.msra.mxu0 %v1973
      %2024 = vmatprep.subr.bf16.mxu0 0
      %2025 = vmatpush2.bf16.msra.mxu0 %v1972
      %2026 = vmatprep.subr.bf16.mxu0 0
      %2027 = vmatpush2.bf16.msra.mxu0 %v1971
      %2028 = vmatprep.subr.bf16.mxu0 0
      %2029 = vmatpush2.bf16.msra.mxu0 %v1970
      %2030 = vmatprep.subr.bf16.mxu0 0
      %2031 = vmatpush2.bf16.msra.mxu0 %v1969
      %2032 = vmatprep.subr.bf16.mxu0 0
      %2033 = vmatpush2.bf16.msra.mxu0 %v1968
      %2034 = vmatprep.subr.bf16.mxu0 0
      %2035 = vmatpush2.bf16.msra.mxu0 %v1967
      %2036 = vmatprep.subr.bf16.mxu0 0
      %2037 = vmatpush2.bf16.msra.mxu0 %v1966
      %2038 = vmatprep.mubr.bf16.mxu0 %v1815
      %2039 = vmatmul.mubr.bf16.gmra.mxu0 %v1814
      %v2040 = vpop.f32.mrf.mxu0
      %v2041 = vadd.f32 0.0, %v2040
      %v2042 = vpop.f32.mrf.mxu0
      %v2043 = vpop.f32.mrf.mxu0
      %v2044 = vadd.f32 0.0, %v2043
      %v2045 = vpop.f32.mrf.mxu0
      %2046 = vmatprep.mubr.bf16.mxu0 %v1818
      %2047 = vmatmul.mubr.bf16.gmra.mxu0 %v1817
      %v2048 = vpop.f32.mrf.mxu0
      %v2049 = vadd.f32 0.0, %v2048
      %v2050 = vpop.f32.mrf.mxu0
      %v2051 = vpop.f32.mrf.mxu0
      %v2052 = vadd.f32 0.0, %v2051
      %v2053 = vpop.f32.mrf.mxu0
      %2054 = vmatprep.mubr.bf16.mxu0 %v1821
      %2055 = vmatmul.mubr.bf16.gmra.mxu0 %v1820
      %v2056 = vpop.f32.mrf.mxu0
      %v2057 = vadd.f32 0.0, %v2056
      %v2058 = vpop.f32.mrf.mxu0
      %v2059 = vpop.f32.mrf.mxu0
      %v2060 = vadd.f32 0.0, %v2059
      %v2061 = vpop.f32.mrf.mxu0
      %2062 = vmatprep.mubr.bf16.mxu0 %v1824
      %2063 = vmatmul.mubr.bf16.gmra.mxu0 %v1823
      %v2064 = vpop.f32.mrf.mxu0
      %v2065 = vadd.f32 0.0, %v2064
      %v2066 = vpop.f32.mrf.mxu0
      %v2067 = vpop.f32.mrf.mxu0
      %v2068 = vadd.f32 0.0, %v2067
      %v2069 = vpop.f32.mrf.mxu0
      %2070 = vmatprep.mubr.bf16.mxu0 %v1827
      %2071 = vmatmul.mubr.bf16.gmra.mxu0 %v1826
      %v2072 = vpop.f32.mrf.mxu0
      %v2073 = vadd.f32 0.0, %v2072
      %v2074 = vpop.f32.mrf.mxu0
      %v2075 = vpop.f32.mrf.mxu0
      %v2076 = vadd.f32 0.0, %v2075
      %v2077 = vpop.f32.mrf.mxu0
      %2078 = vmatprep.mubr.bf16.mxu0 %v1830
      %2079 = vmatmul.mubr.bf16.gmra.mxu0 %v1829
      %v2080 = vpop.f32.mrf.mxu0
      %v2081 = vadd.f32 0.0, %v2080
      %v2082 = vpop.f32.mrf.mxu0
      %v2083 = vpop.f32.mrf.mxu0
      %v2084 = vadd.f32 0.0, %v2083
      %v2085 = vpop.f32.mrf.mxu0
      %2086 = vmatprep.mubr.bf16.mxu0 %v1833
      %2087 = vmatmul.mubr.bf16.gmra.mxu0 %v1832
      %v2088 = vpop.f32.mrf.mxu0
      %v2089 = vadd.f32 0.0, %v2088
      %v2090 = vpop.f32.mrf.mxu0
      %v2091 = vpop.f32.mrf.mxu0
      %v2092 = vadd.f32 0.0, %v2091
      %v2093 = vpop.f32.mrf.mxu0
      %2094 = vmatprep.mubr.bf16.mxu0 %v1836
      %2095 = vmatmul.mubr.bf16.gmra.mxu0 %v1835
      %v2096 = vpop.f32.mrf.mxu0
      %v2097 = vadd.f32 0.0, %v2096
      %v2098 = vpop.f32.mrf.mxu0
      %v2099 = vpop.f32.mrf.mxu0
      %v2100 = vadd.f32 0.0, %v2099
      %v2101 = vpop.f32.mrf.mxu0
      %2102 = vdwg.mxu0
      %2103 = vmatprep.subr.bf16.mxu0 0
      %2104 = vmatpush1.bf16.msra.mxu0 %v1981
      %2105 = vmatprep.subr.bf16.mxu0 0
      %2106 = vmatpush1.bf16.msra.mxu0 %v1980
      %2107 = vmatprep.subr.bf16.mxu0 0
      %2108 = vmatpush1.bf16.msra.mxu0 %v1979
      %2109 = vmatprep.subr.bf16.mxu0 0
      %2110 = vmatpush1.bf16.msra.mxu0 %v1978
      %2111 = vmatprep.subr.bf16.mxu0 0
      %2112 = vmatpush1.bf16.msra.mxu0 %v1977
      %2113 = vmatprep.subr.bf16.mxu0 0
      %2114 = vmatpush1.bf16.msra.mxu0 %v1976
      %2115 = vmatprep.subr.bf16.mxu0 0
      %2116 = vmatpush1.bf16.msra.mxu0 %v1975
      %2117 = vmatprep.subr.bf16.mxu0 0
      %2118 = vmatpush1.bf16.msra.mxu0 %v1974
      %2119 = vmatprep.subr.bf16.mxu0 0
      %2120 = vmatpush2.bf16.msra.mxu0 0
      %2121 = vmatprep.subr.bf16.mxu0 0
      %2122 = vmatpush2.bf16.msra.mxu0 0
      %2123 = vmatprep.subr.bf16.mxu0 0
      %2124 = vmatpush2.bf16.msra.mxu0 0
      %2125 = vmatprep.subr.bf16.mxu0 0
      %2126 = vmatpush2.bf16.msra.mxu0 0
      %2127 = vmatprep.subr.bf16.mxu0 0
      %2128 = vmatpush2.bf16.msra.mxu0 0
      %2129 = vmatprep.subr.bf16.mxu0 0
      %2130 = vmatpush2.bf16.msra.mxu0 0
      %2131 = vmatprep.subr.bf16.mxu0 0
      %2132 = vmatpush2.bf16.msra.mxu0 0
      %2133 = vmatprep.subr.bf16.mxu0 0
      %2134 = vmatpush2.bf16.msra.mxu0 0
      %2135 = vmatprep.mubr.bf16.mxu0 0
      %2136 = vmatmul.mubr.bf16.gmra.mxu0 %v1816
      %v2137 = vpop.f32.mrf.mxu0
      %v2138 = vadd.f32 %v2041, %v2137
      %v2139 = vpop.f32.mrf.mxu0
      %v2140 = vpop.f32.mrf.mxu0
      %v2141 = vadd.f32 %v2044, %v2140
      %v2142 = vpop.f32.mrf.mxu0
      %2143 = vmatprep.mubr.bf16.mxu0 0
      %2144 = vmatmul.mubr.bf16.gmra.mxu0 %v1819
      %v2145 = vpop.f32.mrf.mxu0
      %v2146 = vadd.f32 %v2049, %v2145
      %v2147 = vpop.f32.mrf.mxu0
      %v2148 = vpop.f32.mrf.mxu0
      %v2149 = vadd.f32 %v2052, %v2148
      %v2150 = vpop.f32.mrf.mxu0
      %2151 = vmatprep.mubr.bf16.mxu0 0
      %2152 = vmatmul.mubr.bf16.gmra.mxu0 %v1822
      %v2153 = vpop.f32.mrf.mxu0
      %v2154 = vadd.f32 %v2057, %v2153
      %v2155 = vpop.f32.mrf.mxu0
      %v2156 = vpop.f32.mrf.mxu0
      %v2157 = vadd.f32 %v2060, %v2156
      %v2158 = vpop.f32.mrf.mxu0
      %2159 = vmatprep.mubr.bf16.mxu0 0
      %2160 = vmatmul.mubr.bf16.gmra.mxu0 %v1825
      %v2161 = vpop.f32.mrf.mxu0
      %v2162 = vadd.f32 %v2065, %v2161
      %v2163 = vpop.f32.mrf.mxu0
      %v2164 = vpop.f32.mrf.mxu0
      %v2165 = vadd.f32 %v2068, %v2164
      %v2166 = vpop.f32.mrf.mxu0
      %2167 = vmatprep.mubr.bf16.mxu0 0
      %2168 = vmatmul.mubr.bf16.gmra.mxu0 %v1828
      %v2169 = vpop.f32.mrf.mxu0
      %v2170 = vadd.f32 %v2073, %v2169
      %v2171 = vpop.f32.mrf.mxu0
      %v2172 = vpop.f32.mrf.mxu0
      %v2173 = vadd.f32 %v2076, %v2172
      %v2174 = vpop.f32.mrf.mxu0
      %2175 = vmatprep.mubr.bf16.mxu0 0
      %2176 = vmatmul.mubr.bf16.gmra.mxu0 %v1831
      %v2177 = vpop.f32.mrf.mxu0
      %v2178 = vadd.f32 %v2081, %v2177
      %v2179 = vpop.f32.mrf.mxu0
      %v2180 = vpop.f32.mrf.mxu0
      %v2181 = vadd.f32 %v2084, %v2180
      %v2182 = vpop.f32.mrf.mxu0
      %2183 = vmatprep.mubr.bf16.mxu0 0
      %2184 = vmatmul.mubr.bf16.gmra.mxu0 %v1834
      %v2185 = vpop.f32.mrf.mxu0
      %v2186 = vadd.f32 %v2089, %v2185
      %v2187 = vpop.f32.mrf.mxu0
      %v2188 = vpop.f32.mrf.mxu0
      %v2189 = vadd.f32 %v2092, %v2188
      %v2190 = vpop.f32.mrf.mxu0
      %2191 = vmatprep.mubr.bf16.mxu0 0
      %2192 = vmatmul.mubr.bf16.gmra.mxu0 %v1837
      %v2193 = vpop.f32.mrf.mxu0
      %v2194 = vadd.f32 %v2097, %v2193
      %v2195 = vpop.f32.mrf.mxu0
      %v2196 = vpop.f32.mrf.mxu0
      %v2197 = vadd.f32 %v2100, %v2196
      %v2198 = vpop.f32.mrf.mxu0
      %2199 = vdwg.mxu0
      %v2200 = vadd.f32 %v1636, %v2138
      %v2201 = vadd.f32 %v1637, %v2141
      %v2202 = vadd.f32 %v1638, %v2146
      %v2203 = vadd.f32 %v1639, %v2149
      %v2204 = vadd.f32 %v1640, %v2154
      %v2205 = vadd.f32 %v1641, %v2157
      %v2206 = vadd.f32 %v1642, %v2162
      %v2207 = vadd.f32 %v1643, %v2165
      %v2208 = vadd.f32 %v1644, %v2170
      %v2209 = vadd.f32 %v1645, %v2173
      %v2210 = vadd.f32 %v1646, %v2178
      %v2211 = vadd.f32 %v1647, %v2181
      %v2212 = vadd.f32 %v1648, %v2186
      %v2213 = vadd.f32 %v1649, %v2189
      %v2214 = vadd.f32 %v1650, %v2194
      %v2215 = vadd.f32 %v1651, %v2197
      %s2216 = scalar_lea.vmem [#allocation2], 48
      %v2217 = vld [vmem:[%s2216] sm:$0xff]
      %v2218 = vld [vmem:[%s2216 + $0x8] sm:$0xf]
      %v2219 = vld [vmem:[%s2216 + $0xc] sm:$0xff]
      %v2220 = vld [vmem:[%s2216 + $0x14] sm:$0xf]
      %v2221 = vld [vmem:[%s2216 + $0x18] sm:$0xff]
      %v2222 = vld [vmem:[%s2216 + $0x20] sm:$0xf]
      %v2223 = vld [vmem:[%s2216 + $0x24] sm:$0xff]
      %v2224 = vld [vmem:[%s2216 + $0x2c] sm:$0xf]
      %v2225 = vld [vmem:[%s2216 + $0x30] sm:$0xff]
      %v2226 = vld [vmem:[%s2216 + $0x38] sm:$0xf]
      %v2227 = vld [vmem:[%s2216 + $0x3c] sm:$0xff]
      %v2228 = vld [vmem:[%s2216 + $0x44] sm:$0xf]
      %v2229 = vld [vmem:[%s2216 + $0x48] sm:$0xff]
      %v2230 = vld [vmem:[%s2216 + $0x50] sm:$0xf]
      %v2231 = vld [vmem:[%s2216 + $0x54] sm:$0xff]
      %v2232 = vld [vmem:[%s2216 + $0x5c] sm:$0xf]
      %v2233 = vld [vmem:[%s2216 + $0x60] sm:$0xff]
      %v2234 = vld [vmem:[%s2216 + $0x68] sm:$0xf]
      %v2235 = vld [vmem:[%s2216 + $0x6c] sm:$0xff]
      %v2236 = vld [vmem:[%s2216 + $0x74] sm:$0xf]
      %v2237 = vld [vmem:[%s2216 + $0x78] sm:$0xff]
      %v2238 = vld [vmem:[%s2216 + $0x80] sm:$0xf]
      %v2239 = vld [vmem:[%s2216 + $0x84] sm:$0xff]
      %v2240 = vld [vmem:[%s2216 + $0x8c] sm:$0xf]
      %v2241 = vld [vmem:[%s2216 + $0x90] sm:$0xff]
      %v2242 = vld [vmem:[%s2216 + $0x98] sm:$0xf]
      %v2243 = vld [vmem:[%s2216 + $0x9c] sm:$0xff]
      %v2244 = vld [vmem:[%s2216 + $0xa4] sm:$0xf]
      %v2245 = vld [vmem:[%s2216 + $0xa8] sm:$0xff]
      %v2246 = vld [vmem:[%s2216 + $0xb0] sm:$0xf]
      %v2247 = vld [vmem:[%s2216 + $0xb4] sm:$0xff]
      %v2248 = vld [vmem:[%s2216 + $0xbc] sm:$0xf]
      %s2249 = scalar_lea.vmem %s4, 384
      %v2250 = vld [vmem:[%s2249] sm:$0xf]
      %v2251 = vld [vmem:[%s2249 + $0x4] sm:$0xf]
      %v2252 = vld [vmem:[%s2249 + $0x8] sm:$0xf]
      %v2253 = vld [vmem:[%s2249 + $0xc] sm:$0xf]
      %v2254 = vld [vmem:[%s2249 + $0x10] sm:$0xf]
      %v2255 = vld [vmem:[%s2249 + $0x14] sm:$0xf]
      %v2256 = vld [vmem:[%s2249 + $0x18] sm:$0xf]
      %v2257 = vld [vmem:[%s2249 + $0x1c] sm:$0xf]
      %v2258 = vld [vmem:[%s2249 + $0x20] sm:$0xf]
      %v2259 = vld [vmem:[%s2249 + $0x24] sm:$0xf]
      %v2260 = vld [vmem:[%s2249 + $0x28] sm:$0xf]
      %v2261 = vld [vmem:[%s2249 + $0x2c] sm:$0xf]
      %v2262 = vld [vmem:[%s2249 + $0x30] sm:$0xf]
      %v2263 = vld [vmem:[%s2249 + $0x34] sm:$0xf]
      %v2264 = vld [vmem:[%s2249 + $0x38] sm:$0xf]
      %v2265 = vld [vmem:[%s2249 + $0x3c] sm:$0xf]
      %v2266 = vld [vmem:[%s2249 + $0x40] sm:$0xf]
      %v2267 = vld [vmem:[%s2249 + $0x44] sm:$0xf]
      %v2268 = vld [vmem:[%s2249 + $0x48] sm:$0xf]
      %v2269 = vld [vmem:[%s2249 + $0x4c] sm:$0xf]
      %v2270 = vld [vmem:[%s2249 + $0x50] sm:$0xf]
      %v2271 = vld [vmem:[%s2249 + $0x54] sm:$0xf]
      %v2272 = vld [vmem:[%s2249 + $0x58] sm:$0xf]
      %v2273 = vld [vmem:[%s2249 + $0x5c] sm:$0xf]
      %v2274 = vld [vmem:[%s2249 + $0x60] sm:$0xf]
      %v2275 = vld [vmem:[%s2249 + $0x64] sm:$0xf]
      %v2276 = vld [vmem:[%s2249 + $0x68] sm:$0xf]
      %v2277 = vld [vmem:[%s2249 + $0x6c] sm:$0xf]
      %v2278 = vld [vmem:[%s2249 + $0x70] sm:$0xf]
      %v2279 = vld [vmem:[%s2249 + $0x74] sm:$0xf]
      %v2280 = vld [vmem:[%s2249 + $0x78] sm:$0xf]
      %v2281 = vld [vmem:[%s2249 + $0x7c] sm:$0xf]
      %v2282 = vld [vmem:[%s2249 + $0x80] sm:$0xf]
      %v2283 = vld [vmem:[%s2249 + $0x84] sm:$0xf]
      %v2284 = vld [vmem:[%s2249 + $0x88] sm:$0xf]
      %v2285 = vld [vmem:[%s2249 + $0x8c] sm:$0xf]
      %v2286 = vld [vmem:[%s2249 + $0x90] sm:$0xf]
      %v2287 = vld [vmem:[%s2249 + $0x94] sm:$0xf]
      %v2288 = vld [vmem:[%s2249 + $0x98] sm:$0xf]
      %v2289 = vld [vmem:[%s2249 + $0x9c] sm:$0xf]
      %v2290 = vld [vmem:[%s2249 + $0xa0] sm:$0xf]
      %v2291 = vld [vmem:[%s2249 + $0xa4] sm:$0xf]
      %v2292 = vld [vmem:[%s2249 + $0xa8] sm:$0xf]
      %v2293 = vld [vmem:[%s2249 + $0xac] sm:$0xf]
      %v2294 = vld [vmem:[%s2249 + $0xb0] sm:$0xf]
      %v2295 = vld [vmem:[%s2249 + $0xb4] sm:$0xf]
      %v2296 = vld [vmem:[%s2249 + $0xb8] sm:$0xf]
      %v2297 = vld [vmem:[%s2249 + $0xbc] sm:$0xf]
      %v2330 = vunpack.c.l.b16 %v2217
      %v2331 = vunpack.c.h.b16 %v2217
      %v2332 = vunpack.c.l.b16 %v2218
      %v2333 = vunpack.c.l.b16 %v2219
      %v2334 = vunpack.c.h.b16 %v2219
      %v2335 = vunpack.c.l.b16 %v2220
      %v2336 = vunpack.c.l.b16 %v2221
      %v2337 = vunpack.c.h.b16 %v2221
      %v2338 = vunpack.c.l.b16 %v2222
      %v2339 = vunpack.c.l.b16 %v2223
      %v2340 = vunpack.c.h.b16 %v2223
      %v2341 = vunpack.c.l.b16 %v2224
      %v2342 = vunpack.c.l.b16 %v2225
      %v2343 = vunpack.c.h.b16 %v2225
      %v2344 = vunpack.c.l.b16 %v2226
      %v2345 = vunpack.c.l.b16 %v2227
      %v2346 = vunpack.c.h.b16 %v2227
      %v2347 = vunpack.c.l.b16 %v2228
      %v2348 = vunpack.c.l.b16 %v2229
      %v2349 = vunpack.c.h.b16 %v2229
      %v2350 = vunpack.c.l.b16 %v2230
      %v2351 = vunpack.c.l.b16 %v2231
      %v2352 = vunpack.c.h.b16 %v2231
      %v2353 = vunpack.c.l.b16 %v2232
      %v2354 = vunpack.c.l.b16 %v2233
      %v2355 = vunpack.c.h.b16 %v2233
      %v2356 = vunpack.c.l.b16 %v2234
      %v2357 = vunpack.c.l.b16 %v2235
      %v2358 = vunpack.c.h.b16 %v2235
      %v2359 = vunpack.c.l.b16 %v2236
      %v2360 = vunpack.c.l.b16 %v2237
      %v2361 = vunpack.c.h.b16 %v2237
      %v2362 = vunpack.c.l.b16 %v2238
      %v2363 = vunpack.c.l.b16 %v2239
      %v2364 = vunpack.c.h.b16 %v2239
      %v2365 = vunpack.c.l.b16 %v2240
      %v2366 = vunpack.c.l.b16 %v2241
      %v2367 = vunpack.c.h.b16 %v2241
      %v2368 = vunpack.c.l.b16 %v2242
      %v2369 = vunpack.c.l.b16 %v2243
      %v2370 = vunpack.c.h.b16 %v2243
      %v2371 = vunpack.c.l.b16 %v2244
      %v2372 = vunpack.c.l.b16 %v2245
      %v2373 = vunpack.c.h.b16 %v2245
      %v2374 = vunpack.c.l.b16 %v2246
      %v2375 = vunpack.c.l.b16 %v2247
      %v2376 = vunpack.c.h.b16 %v2247
      %v2377 = vunpack.c.l.b16 %v2248
      %v2378 = vpack.c.b16 %v2333, %v2330
      %v2379 = vpack.c.b16 %v2334, %v2331
      %v2380 = vpack.c.b16 %v2335, %v2332
      %v2381 = vpack.c.b16 %v2339, %v2336
      %v2382 = vpack.c.b16 %v2340, %v2337
      %v2383 = vpack.c.b16 %v2341, %v2338
      %v2384 = vpack.c.b16 %v2345, %v2342
      %v2385 = vpack.c.b16 %v2346, %v2343
      %v2386 = vpack.c.b16 %v2347, %v2344
      %v2387 = vpack.c.b16 %v2351, %v2348
      %v2388 = vpack.c.b16 %v2352, %v2349
      %v2389 = vpack.c.b16 %v2353, %v2350
      %v2390 = vpack.c.b16 %v2357, %v2354
      %v2391 = vpack.c.b16 %v2358, %v2355
      %v2392 = vpack.c.b16 %v2359, %v2356
      %v2393 = vpack.c.b16 %v2363, %v2360
      %v2394 = vpack.c.b16 %v2364, %v2361
      %v2395 = vpack.c.b16 %v2365, %v2362
      %v2396 = vpack.c.b16 %v2369, %v2366
      %v2397 = vpack.c.b16 %v2370, %v2367
      %v2398 = vpack.c.b16 %v2371, %v2368
      %v2399 = vpack.c.b16 %v2375, %v2372
      %v2400 = vpack.c.b16 %v2376, %v2373
      %v2401 = vpack.c.b16 %v2377, %v2374
      %v2474 = vunpack.c.l.b16 %v2250
      %v2475 = vunpack.c.l.b16 %v2251
      %v2476 = vunpack.c.l.b16 %v2252
      %v2477 = vunpack.c.l.b16 %v2253
      %v2478 = vunpack.c.l.b16 %v2254
      %v2479 = vunpack.c.l.b16 %v2255
      %v2480 = vunpack.c.l.b16 %v2256
      %v2481 = vunpack.c.l.b16 %v2257
      %v2482 = vunpack.c.l.b16 %v2258
      %v2483 = vunpack.c.l.b16 %v2259
      %v2484 = vunpack.c.l.b16 %v2260
      %v2485 = vunpack.c.l.b16 %v2261
      %v2486 = vunpack.c.l.b16 %v2262
      %v2487 = vunpack.c.l.b16 %v2263
      %v2488 = vunpack.c.l.b16 %v2264
      %v2489 = vunpack.c.l.b16 %v2265
      %v2490 = vunpack.c.l.b16 %v2266
      %v2491 = vunpack.c.l.b16 %v2267
      %v2492 = vunpack.c.l.b16 %v2268
      %v2493 = vunpack.c.l.b16 %v2269
      %v2494 = vunpack.c.l.b16 %v2270
      %v2495 = vunpack.c.l.b16 %v2271
      %v2496 = vunpack.c.l.b16 %v2272
      %v2497 = vunpack.c.l.b16 %v2273
      %v2498 = vunpack.c.l.b16 %v2274
      %v2499 = vunpack.c.l.b16 %v2275
      %v2500 = vunpack.c.l.b16 %v2276
      %v2501 = vunpack.c.l.b16 %v2277
      %v2502 = vunpack.c.l.b16 %v2278
      %v2503 = vunpack.c.l.b16 %v2279
      %v2504 = vunpack.c.l.b16 %v2280
      %v2505 = vunpack.c.l.b16 %v2281
      %v2506 = vunpack.c.l.b16 %v2282
      %v2507 = vunpack.c.l.b16 %v2283
      %v2508 = vunpack.c.l.b16 %v2284
      %v2509 = vunpack.c.l.b16 %v2285
      %v2510 = vunpack.c.l.b16 %v2286
      %v2511 = vunpack.c.l.b16 %v2287
      %v2512 = vunpack.c.l.b16 %v2288
      %v2513 = vunpack.c.l.b16 %v2289
      %v2514 = vunpack.c.l.b16 %v2290
      %v2515 = vunpack.c.l.b16 %v2291
      %v2516 = vunpack.c.l.b16 %v2292
      %v2517 = vunpack.c.l.b16 %v2293
      %v2518 = vunpack.c.l.b16 %v2294
      %v2519 = vunpack.c.l.b16 %v2295
      %v2520 = vunpack.c.l.b16 %v2296
      %v2521 = vunpack.c.l.b16 %v2297
      %v2522 = vpack.c.b16 %v2475, %v2474
      %v2523 = vpack.c.b16 %v2477, %v2476
      %v2524 = vpack.c.b16 %v2479, %v2478
      %v2525 = vpack.c.b16 %v2481, %v2480
      %v2526 = vpack.c.b16 %v2483, %v2482
      %v2527 = vpack.c.b16 %v2485, %v2484
      %v2528 = vpack.c.b16 %v2487, %v2486
      %v2529 = vpack.c.b16 %v2489, %v2488
      %v2530 = vpack.c.b16 %v2491, %v2490
      %v2531 = vpack.c.b16 %v2493, %v2492
      %v2532 = vpack.c.b16 %v2495, %v2494
      %v2533 = vpack.c.b16 %v2497, %v2496
      %v2534 = vpack.c.b16 %v2499, %v2498
      %v2535 = vpack.c.b16 %v2501, %v2500
      %v2536 = vpack.c.b16 %v2503, %v2502
      %v2537 = vpack.c.b16 %v2505, %v2504
      %v2538 = vpack.c.b16 %v2507, %v2506
      %v2539 = vpack.c.b16 %v2509, %v2508
      %v2540 = vpack.c.b16 %v2511, %v2510
      %v2541 = vpack.c.b16 %v2513, %v2512
      %v2542 = vpack.c.b16 %v2515, %v2514
      %v2543 = vpack.c.b16 %v2517, %v2516
      %v2544 = vpack.c.b16 %v2519, %v2518
      %v2545 = vpack.c.b16 %v2521, %v2520
      %2570 = vmatprep.subr.bf16.mxu0 0
      %2571 = vmatpush1.bf16.msra.mxu0 %v2529
      %2572 = vmatprep.subr.bf16.mxu0 0
      %2573 = vmatpush1.bf16.msra.mxu0 %v2528
      %2574 = vmatprep.subr.bf16.mxu0 0
      %2575 = vmatpush1.bf16.msra.mxu0 %v2527
      %2576 = vmatprep.subr.bf16.mxu0 0
      %2577 = vmatpush1.bf16.msra.mxu0 %v2526
      %2578 = vmatprep.subr.bf16.mxu0 0
      %2579 = vmatpush1.bf16.msra.mxu0 %v2525
      %2580 = vmatprep.subr.bf16.mxu0 0
      %2581 = vmatpush1.bf16.msra.mxu0 %v2524
      %2582 = vmatprep.subr.bf16.mxu0 0
      %2583 = vmatpush1.bf16.msra.mxu0 %v2523
      %2584 = vmatprep.subr.bf16.mxu0 0
      %2585 = vmatpush1.bf16.msra.mxu0 %v2522
      %2586 = vmatprep.subr.bf16.mxu0 0
      %2587 = vmatpush2.bf16.msra.mxu0 %v2537
      %2588 = vmatprep.subr.bf16.mxu0 0
      %2589 = vmatpush2.bf16.msra.mxu0 %v2536
      %2590 = vmatprep.subr.bf16.mxu0 0
      %2591 = vmatpush2.bf16.msra.mxu0 %v2535
      %2592 = vmatprep.subr.bf16.mxu0 0
      %2593 = vmatpush2.bf16.msra.mxu0 %v2534
      %2594 = vmatprep.subr.bf16.mxu0 0
      %2595 = vmatpush2.bf16.msra.mxu0 %v2533
      %2596 = vmatprep.subr.bf16.mxu0 0
      %2597 = vmatpush2.bf16.msra.mxu0 %v2532
      %2598 = vmatprep.subr.bf16.mxu0 0
      %2599 = vmatpush2.bf16.msra.mxu0 %v2531
      %2600 = vmatprep.subr.bf16.mxu0 0
      %2601 = vmatpush2.bf16.msra.mxu0 %v2530
      %2602 = vmatprep.mubr.bf16.mxu0 %v2379
      %2603 = vmatmul.mubr.bf16.gmra.mxu0 %v2378
      %v2604 = vpop.f32.mrf.mxu0
      %v2605 = vadd.f32 0.0, %v2604
      %v2606 = vpop.f32.mrf.mxu0
      %v2607 = vpop.f32.mrf.mxu0
      %v2608 = vadd.f32 0.0, %v2607
      %v2609 = vpop.f32.mrf.mxu0
      %2610 = vmatprep.mubr.bf16.mxu0 %v2382
      %2611 = vmatmul.mubr.bf16.gmra.mxu0 %v2381
      %v2612 = vpop.f32.mrf.mxu0
      %v2613 = vadd.f32 0.0, %v2612
      %v2614 = vpop.f32.mrf.mxu0
      %v2615 = vpop.f32.mrf.mxu0
      %v2616 = vadd.f32 0.0, %v2615
      %v2617 = vpop.f32.mrf.mxu0
      %2618 = vmatprep.mubr.bf16.mxu0 %v2385
      %2619 = vmatmul.mubr.bf16.gmra.mxu0 %v2384
      %v2620 = vpop.f32.mrf.mxu0
      %v2621 = vadd.f32 0.0, %v2620
      %v2622 = vpop.f32.mrf.mxu0
      %v2623 = vpop.f32.mrf.mxu0
      %v2624 = vadd.f32 0.0, %v2623
      %v2625 = vpop.f32.mrf.mxu0
      %2626 = vmatprep.mubr.bf16.mxu0 %v2388
      %2627 = vmatmul.mubr.bf16.gmra.mxu0 %v2387
      %v2628 = vpop.f32.mrf.mxu0
      %v2629 = vadd.f32 0.0, %v2628
      %v2630 = vpop.f32.mrf.mxu0
      %v2631 = vpop.f32.mrf.mxu0
      %v2632 = vadd.f32 0.0, %v2631
      %v2633 = vpop.f32.mrf.mxu0
      %2634 = vmatprep.mubr.bf16.mxu0 %v2391
      %2635 = vmatmul.mubr.bf16.gmra.mxu0 %v2390
      %v2636 = vpop.f32.mrf.mxu0
      %v2637 = vadd.f32 0.0, %v2636
      %v2638 = vpop.f32.mrf.mxu0
      %v2639 = vpop.f32.mrf.mxu0
      %v2640 = vadd.f32 0.0, %v2639
      %v2641 = vpop.f32.mrf.mxu0
      %2642 = vmatprep.mubr.bf16.mxu0 %v2394
      %2643 = vmatmul.mubr.bf16.gmra.mxu0 %v2393
      %v2644 = vpop.f32.mrf.mxu0
      %v2645 = vadd.f32 0.0, %v2644
      %v2646 = vpop.f32.mrf.mxu0
      %v2647 = vpop.f32.mrf.mxu0
      %v2648 = vadd.f32 0.0, %v2647
      %v2649 = vpop.f32.mrf.mxu0
      %2650 = vmatprep.mubr.bf16.mxu0 %v2397
      %2651 = vmatmul.mubr.bf16.gmra.mxu0 %v2396
      %v2652 = vpop.f32.mrf.mxu0
      %v2653 = vadd.f32 0.0, %v2652
      %v2654 = vpop.f32.mrf.mxu0
      %v2655 = vpop.f32.mrf.mxu0
      %v2656 = vadd.f32 0.0, %v2655
      %v2657 = vpop.f32.mrf.mxu0
      %2658 = vmatprep.mubr.bf16.mxu0 %v2400
      %2659 = vmatmul.mubr.bf16.gmra.mxu0 %v2399
      %v2660 = vpop.f32.mrf.mxu0
      %v2661 = vadd.f32 0.0, %v2660
      %v2662 = vpop.f32.mrf.mxu0
      %v2663 = vpop.f32.mrf.mxu0
      %v2664 = vadd.f32 0.0, %v2663
      %v2665 = vpop.f32.mrf.mxu0
      %2666 = vdwg.mxu0
      %2667 = vmatprep.subr.bf16.mxu0 0
      %2668 = vmatpush1.bf16.msra.mxu0 %v2545
      %2669 = vmatprep.subr.bf16.mxu0 0
      %2670 = vmatpush1.bf16.msra.mxu0 %v2544
      %2671 = vmatprep.subr.bf16.mxu0 0
      %2672 = vmatpush1.bf16.msra.mxu0 %v2543
      %2673 = vmatprep.subr.bf16.mxu0 0
      %2674 = vmatpush1.bf16.msra.mxu0 %v2542
      %2675 = vmatprep.subr.bf16.mxu0 0
      %2676 = vmatpush1.bf16.msra.mxu0 %v2541
      %2677 = vmatprep.subr.bf16.mxu0 0
      %2678 = vmatpush1.bf16.msra.mxu0 %v2540
      %2679 = vmatprep.subr.bf16.mxu0 0
      %2680 = vmatpush1.bf16.msra.mxu0 %v2539
      %2681 = vmatprep.subr.bf16.mxu0 0
      %2682 = vmatpush1.bf16.msra.mxu0 %v2538
      %2683 = vmatprep.subr.bf16.mxu0 0
      %2684 = vmatpush2.bf16.msra.mxu0 0
      %2685 = vmatprep.subr.bf16.mxu0 0
      %2686 = vmatpush2.bf16.msra.mxu0 0
      %2687 = vmatprep.subr.bf16.mxu0 0
      %2688 = vmatpush2.bf16.msra.mxu0 0
      %2689 = vmatprep.subr.bf16.mxu0 0
      %2690 = vmatpush2.bf16.msra.mxu0 0
      %2691 = vmatprep.subr.bf16.mxu0 0
      %2692 = vmatpush2.bf16.msra.mxu0 0
      %2693 = vmatprep.subr.bf16.mxu0 0
      %2694 = vmatpush2.bf16.msra.mxu0 0
      %2695 = vmatprep.subr.bf16.mxu0 0
      %2696 = vmatpush2.bf16.msra.mxu0 0
      %2697 = vmatprep.subr.bf16.mxu0 0
      %2698 = vmatpush2.bf16.msra.mxu0 0
      %2699 = vmatprep.mubr.bf16.mxu0 0
      %2700 = vmatmul.mubr.bf16.gmra.mxu0 %v2380
      %v2701 = vpop.f32.mrf.mxu0
      %v2702 = vadd.f32 %v2605, %v2701
      %v2703 = vpop.f32.mrf.mxu0
      %v2704 = vpop.f32.mrf.mxu0
      %v2705 = vadd.f32 %v2608, %v2704
      %v2706 = vpop.f32.mrf.mxu0
      %2707 = vmatprep.mubr.bf16.mxu0 0
      %2708 = vmatmul.mubr.bf16.gmra.mxu0 %v2383
      %v2709 = vpop.f32.mrf.mxu0
      %v2710 = vadd.f32 %v2613, %v2709
      %v2711 = vpop.f32.mrf.mxu0
      %v2712 = vpop.f32.mrf.mxu0
      %v2713 = vadd.f32 %v2616, %v2712
      %v2714 = vpop.f32.mrf.mxu0
      %2715 = vmatprep.mubr.bf16.mxu0 0
      %2716 = vmatmul.mubr.bf16.gmra.mxu0 %v2386
      %v2717 = vpop.f32.mrf.mxu0
      %v2718 = vadd.f32 %v2621, %v2717
      %v2719 = vpop.f32.mrf.mxu0
      %v2720 = vpop.f32.mrf.mxu0
      %v2721 = vadd.f32 %v2624, %v2720
      %v2722 = vpop.f32.mrf.mxu0
      %2723 = vmatprep.mubr.bf16.mxu0 0
      %2724 = vmatmul.mubr.bf16.gmra.mxu0 %v2389
      %v2725 = vpop.f32.mrf.mxu0
      %v2726 = vadd.f32 %v2629, %v2725
      %v2727 = vpop.f32.mrf.mxu0
      %v2728 = vpop.f32.mrf.mxu0
      %v2729 = vadd.f32 %v2632, %v2728
      %v2730 = vpop.f32.mrf.mxu0
      %2731 = vmatprep.mubr.bf16.mxu0 0
      %2732 = vmatmul.mubr.bf16.gmra.mxu0 %v2392
      %v2733 = vpop.f32.mrf.mxu0
      %v2734 = vadd.f32 %v2637, %v2733
      %v2735 = vpop.f32.mrf.mxu0
      %v2736 = vpop.f32.mrf.mxu0
      %v2737 = vadd.f32 %v2640, %v2736
      %v2738 = vpop.f32.mrf.mxu0
      %2739 = vmatprep.mubr.bf16.mxu0 0
      %2740 = vmatmul.mubr.bf16.gmra.mxu0 %v2395
      %v2741 = vpop.f32.mrf.mxu0
      %v2742 = vadd.f32 %v2645, %v2741
      %v2743 = vpop.f32.mrf.mxu0
      %v2744 = vpop.f32.mrf.mxu0
      %v2745 = vadd.f32 %v2648, %v2744
      %v2746 = vpop.f32.mrf.mxu0
      %2747 = vmatprep.mubr.bf16.mxu0 0
      %2748 = vmatmul.mubr.bf16.gmra.mxu0 %v2398
      %v2749 = vpop.f32.mrf.mxu0
      %v2750 = vadd.f32 %v2653, %v2749
      %v2751 = vpop.f32.mrf.mxu0
      %v2752 = vpop.f32.mrf.mxu0
      %v2753 = vadd.f32 %v2656, %v2752
      %v2754 = vpop.f32.mrf.mxu0
      %2755 = vmatprep.mubr.bf16.mxu0 0
      %2756 = vmatmul.mubr.bf16.gmra.mxu0 %v2401
      %v2757 = vpop.f32.mrf.mxu0
      %v2758 = vadd.f32 %v2661, %v2757
      %v2759 = vpop.f32.mrf.mxu0
      %v2760 = vpop.f32.mrf.mxu0
      %v2761 = vadd.f32 %v2664, %v2760
      %v2762 = vpop.f32.mrf.mxu0
      %2763 = vdwg.mxu0
      %v2764 = vadd.f32 %v2200, %v2702
      %v2765 = vadd.f32 %v2201, %v2705
      %v2766 = vadd.f32 %v2202, %v2710
      %v2767 = vadd.f32 %v2203, %v2713
      %v2768 = vadd.f32 %v2204, %v2718
      %v2769 = vadd.f32 %v2205, %v2721
      %v2770 = vadd.f32 %v2206, %v2726
      %v2771 = vadd.f32 %v2207, %v2729
      %v2772 = vadd.f32 %v2208, %v2734
      %v2773 = vadd.f32 %v2209, %v2737
      %v2774 = vadd.f32 %v2210, %v2742
      %v2775 = vadd.f32 %v2211, %v2745
      %v2776 = vadd.f32 %v2212, %v2750
      %v2777 = vadd.f32 %v2213, %v2753
      %v2778 = vadd.f32 %v2214, %v2758
      %v2779 = vadd.f32 %v2215, %v2761
      %v2780 = vmul.f32 %v2764, 0.01
      %v2781 = vmul.f32 %v2765, 0.01
      %v2782 = vmul.f32 %v2766, 0.01
      %v2783 = vmul.f32 %v2767, 0.01
      %v2784 = vmul.f32 %v2768, 0.01
      %v2785 = vmul.f32 %v2769, 0.01
      %v2786 = vmul.f32 %v2770, 0.01
      %v2787 = vmul.f32 %v2771, 0.01
      %v2788 = vmul.f32 %v2772, 0.01
      %v2789 = vmul.f32 %v2773, 0.01
      %v2790 = vmul.f32 %v2774, 0.01
      %v2791 = vmul.f32 %v2775, 0.01
      %v2792 = vmul.f32 %v2776, 0.01
      %v2793 = vmul.f32 %v2777, 0.01
      %v2794 = vmul.f32 %v2778, 0.01
      %v2795 = vmul.f32 %v2779, 0.01
      %v2796 = vmax.f32 %v2764, %v2780
      %v2797 = vmax.f32 %v2765, %v2781
      %v2798 = vmax.f32 %v2766, %v2782
      %v2799 = vmax.f32 %v2767, %v2783
      %v2800 = vmax.f32 %v2768, %v2784
      %v2801 = vmax.f32 %v2769, %v2785
      %v2802 = vmax.f32 %v2770, %v2786
      %v2803 = vmax.f32 %v2771, %v2787
      %v2804 = vmax.f32 %v2772, %v2788
      %v2805 = vmax.f32 %v2773, %v2789
      %v2806 = vmax.f32 %v2774, %v2790
      %v2807 = vmax.f32 %v2775, %v2791
      %v2808 = vmax.f32 %v2776, %v2792
      %v2809 = vmax.f32 %v2777, %v2793
      %v2810 = vmax.f32 %v2778, %v2794
      %v2811 = vmax.f32 %v2779, %v2795
      %v2812 = vpack.c.bf16 %v2797, %v2796
      %v2813 = vpack.c.bf16 %v2799, %v2798
      %v2814 = vpack.c.bf16 %v2801, %v2800
      %v2815 = vpack.c.bf16 %v2803, %v2802
      %v2816 = vpack.c.bf16 %v2805, %v2804
      %v2817 = vpack.c.bf16 %v2807, %v2806
      %v2818 = vpack.c.bf16 %v2809, %v2808
      %v2819 = vpack.c.bf16 %v2811, %v2810
      %v2820 = vld [vmem:[%s6] sm:$0xf]
      %v2821 = vld [vmem:[%s6 + $0x4] sm:$0xf]
      %v2822 = vld [vmem:[%s6 + $0x8] sm:$0xf]
      %v2823 = vld [vmem:[%s6 + $0xc] sm:$0xf]
      %v2824 = vld [vmem:[%s6 + $0x10] sm:$0xf]
      %v2825 = vld [vmem:[%s6 + $0x14] sm:$0xf]
      %v2826 = vld [vmem:[%s6 + $0x18] sm:$0xf]
      %v2827 = vld [vmem:[%s6 + $0x1c] sm:$0xf]
      %v2828 = vld [vmem:[%s6 + $0x20] sm:$0xf]
      %v2829 = vld [vmem:[%s6 + $0x24] sm:$0xf]
      %v2830 = vld [vmem:[%s6 + $0x28] sm:$0xf]
      %v2831 = vld [vmem:[%s6 + $0x2c] sm:$0xf]
      %v2832 = vld [vmem:[%s6 + $0x30] sm:$0xf]
      %v2833 = vld [vmem:[%s6 + $0x34] sm:$0xf]
      %v2834 = vld [vmem:[%s6 + $0x38] sm:$0xf]
      %v2835 = vld [vmem:[%s6 + $0x3c] sm:$0xf]
      %v2836 = vld [vmem:[%s362] sm:$0xf]
      %v2837 = vld [vmem:[%s362 + $0x4] sm:$0xf]
      %v2838 = vld [vmem:[%s362 + $0x8] sm:$0xf]
      %v2839 = vld [vmem:[%s362 + $0xc] sm:$0xf]
      %v2840 = vld [vmem:[%s362 + $0x10] sm:$0xf]
      %v2841 = vld [vmem:[%s362 + $0x14] sm:$0xf]
      %v2842 = vld [vmem:[%s362 + $0x18] sm:$0xf]
      %v2843 = vld [vmem:[%s362 + $0x1c] sm:$0xf]
      %v2844 = vld [vmem:[%s362 + $0x20] sm:$0xf]
      %v2845 = vld [vmem:[%s362 + $0x24] sm:$0xf]
      %v2846 = vld [vmem:[%s362 + $0x28] sm:$0xf]
      %v2847 = vld [vmem:[%s362 + $0x2c] sm:$0xf]
      %v2848 = vld [vmem:[%s362 + $0x30] sm:$0xf]
      %v2849 = vld [vmem:[%s362 + $0x34] sm:$0xf]
      %v2850 = vld [vmem:[%s362 + $0x38] sm:$0xf]
      %v2851 = vld [vmem:[%s362 + $0x3c] sm:$0xf]
      %v2852 = vunpack.c.l.bf16 %v2836
      %v2853 = vunpack.c.l.bf16 %v2837
      %v2854 = vunpack.c.l.bf16 %v2838
      %v2855 = vunpack.c.l.bf16 %v2839
      %v2856 = vunpack.c.l.bf16 %v2840
      %v2857 = vunpack.c.l.bf16 %v2841
      %v2858 = vunpack.c.l.bf16 %v2842
      %v2859 = vunpack.c.l.bf16 %v2843
      %v2860 = vunpack.c.l.bf16 %v2844
      %v2861 = vunpack.c.l.bf16 %v2845
      %v2862 = vunpack.c.l.bf16 %v2846
      %v2863 = vunpack.c.l.bf16 %v2847
      %v2864 = vunpack.c.l.bf16 %v2848
      %v2865 = vunpack.c.l.bf16 %v2849
      %v2866 = vunpack.c.l.bf16 %v2850
      %v2867 = vunpack.c.l.bf16 %v2851
      %v2868 = vld [vmem:[%s7] sm:$0x1]
      %v2870 = vlaneseq
      %v2871 = vshrl.u32 %v2870, 7
      %v2872 = vsub.s32 0, %v2871
      %v2873 = vrot.slane %v2868, %v2872
      %v2891 = vunpack.c.l.b16 %v2820
      %v2892 = vunpack.c.l.b16 %v2821
      %v2893 = vunpack.c.l.b16 %v2822
      %v2894 = vunpack.c.l.b16 %v2823
      %v2895 = vunpack.c.l.b16 %v2824
      %v2896 = vunpack.c.l.b16 %v2825
      %v2897 = vunpack.c.l.b16 %v2826
      %v2898 = vunpack.c.l.b16 %v2827
      %v2899 = vunpack.c.l.b16 %v2828
      %v2900 = vunpack.c.l.b16 %v2829
      %v2901 = vunpack.c.l.b16 %v2830
      %v2902 = vunpack.c.l.b16 %v2831
      %v2903 = vunpack.c.l.b16 %v2832
      %v2904 = vunpack.c.l.b16 %v2833
      %v2905 = vunpack.c.l.b16 %v2834
      %v2906 = vunpack.c.l.b16 %v2835
      %v2907 = vpack.c.b16 %v2892, %v2891
      %v2908 = vpack.c.b16 %v2894, %v2893
      %v2909 = vpack.c.b16 %v2896, %v2895
      %v2910 = vpack.c.b16 %v2898, %v2897
      %v2911 = vpack.c.b16 %v2900, %v2899
      %v2912 = vpack.c.b16 %v2902, %v2901
      %v2913 = vpack.c.b16 %v2904, %v2903
      %v2914 = vpack.c.b16 %v2906, %v2905
      %2923 = vmatprep.subr.bf16.mxu0 0
      %2924 = vmatpush1.bf16.msra.mxu0 %v2914
      %2925 = vmatprep.subr.bf16.mxu0 0
      %2926 = vmatpush1.bf16.msra.mxu0 %v2913
      %2927 = vmatprep.subr.bf16.mxu0 0
      %2928 = vmatpush1.bf16.msra.mxu0 %v2912
      %2929 = vmatprep.subr.bf16.mxu0 0
      %2930 = vmatpush1.bf16.msra.mxu0 %v2911
      %2931 = vmatprep.subr.bf16.mxu0 0
      %2932 = vmatpush1.bf16.msra.mxu0 %v2910
      %2933 = vmatprep.subr.bf16.mxu0 0
      %2934 = vmatpush1.bf16.msra.mxu0 %v2909
      %2935 = vmatprep.subr.bf16.mxu0 0
      %2936 = vmatpush1.bf16.msra.mxu0 %v2908
      %2937 = vmatprep.subr.bf16.mxu0 0
      %2938 = vmatpush1.bf16.msra.mxu0 %v2907
      %2939 = vmatprep.subr.bf16.mxu0 0
      %2940 = vmatpush2.bf16.msra.mxu0 0
      %2941 = vmatprep.subr.bf16.mxu0 0
      %2942 = vmatpush2.bf16.msra.mxu0 0
      %2943 = vmatprep.subr.bf16.mxu0 0
      %2944 = vmatpush2.bf16.msra.mxu0 0
      %2945 = vmatprep.subr.bf16.mxu0 0
      %2946 = vmatpush2.bf16.msra.mxu0 0
      %2947 = vmatprep.subr.bf16.mxu0 0
      %2948 = vmatpush2.bf16.msra.mxu0 0
      %2949 = vmatprep.subr.bf16.mxu0 0
      %2950 = vmatpush2.bf16.msra.mxu0 0
      %2951 = vmatprep.subr.bf16.mxu0 0
      %2952 = vmatpush2.bf16.msra.mxu0 0
      %2953 = vmatprep.subr.bf16.mxu0 0
      %2954 = vmatpush2.bf16.msra.mxu0 0
      %2955 = vmatprep.mubr.bf16.mxu0 0
      %2956 = vmatmul.mubr.bf16.gmra.mxu0 %v2812
      %v2957 = vpop.f32.mrf.mxu0
      %v2958 = vadd.f32 %v2873, %v2957
      %v2959 = vpop.f32.mrf.mxu0
      %v2960 = vpop.f32.mrf.mxu0
      %v2961 = vadd.f32 %v2873, %v2960
      %v2962 = vpop.f32.mrf.mxu0
      %2963 = vmatprep.mubr.bf16.mxu0 0
      %2964 = vmatmul.mubr.bf16.gmra.mxu0 %v2813
      %v2965 = vpop.f32.mrf.mxu0
      %v2966 = vadd.f32 %v2873, %v2965
      %v2967 = vpop.f32.mrf.mxu0
      %v2968 = vpop.f32.mrf.mxu0
      %v2969 = vadd.f32 %v2873, %v2968
      %v2970 = vpop.f32.mrf.mxu0
      %2971 = vmatprep.mubr.bf16.mxu0 0
      %2972 = vmatmul.mubr.bf16.gmra.mxu0 %v2814
      %v2973 = vpop.f32.mrf.mxu0
      %v2974 = vadd.f32 %v2873, %v2973
      %v2975 = vpop.f32.mrf.mxu0
      %v2976 = vpop.f32.mrf.mxu0
      %v2977 = vadd.f32 %v2873, %v2976
      %v2978 = vpop.f32.mrf.mxu0
      %2979 = vmatprep.mubr.bf16.mxu0 0
      %2980 = vmatmul.mubr.bf16.gmra.mxu0 %v2815
      %v2981 = vpop.f32.mrf.mxu0
      %v2982 = vadd.f32 %v2873, %v2981
      %v2983 = vpop.f32.mrf.mxu0
      %v2984 = vpop.f32.mrf.mxu0
      %v2985 = vadd.f32 %v2873, %v2984
      %v2986 = vpop.f32.mrf.mxu0
      %2987 = vmatprep.mubr.bf16.mxu0 0
      %2988 = vmatmul.mubr.bf16.gmra.mxu0 %v2816
      %v2989 = vpop.f32.mrf.mxu0
      %v2990 = vadd.f32 %v2873, %v2989
      %v2991 = vpop.f32.mrf.mxu0
      %v2992 = vpop.f32.mrf.mxu0
      %v2993 = vadd.f32 %v2873, %v2992
      %v2994 = vpop.f32.mrf.mxu0
      %2995 = vmatprep.mubr.bf16.mxu0 0
      %2996 = vmatmul.mubr.bf16.gmra.mxu0 %v2817
      %v2997 = vpop.f32.mrf.mxu0
      %v2998 = vadd.f32 %v2873, %v2997
      %v2999 = vpop.f32.mrf.mxu0
      %v3000 = vpop.f32.mrf.mxu0
      %v3001 = vadd.f32 %v2873, %v3000
      %v3002 = vpop.f32.mrf.mxu0
      %3003 = vmatprep.mubr.bf16.mxu0 0
      %3004 = vmatmul.mubr.bf16.gmra.mxu0 %v2818
      %v3005 = vpop.f32.mrf.mxu0
      %v3006 = vadd.f32 %v2873, %v3005
      %v3007 = vpop.f32.mrf.mxu0
      %v3008 = vpop.f32.mrf.mxu0
      %v3009 = vadd.f32 %v2873, %v3008
      %v3010 = vpop.f32.mrf.mxu0
      %3011 = vmatprep.mubr.bf16.mxu0 0
      %3012 = vmatmul.mubr.bf16.gmra.mxu0 %v2819
      %v3013 = vpop.f32.mrf.mxu0
      %v3014 = vadd.f32 %v2873, %v3013
      %v3015 = vpop.f32.mrf.mxu0
      %v3016 = vpop.f32.mrf.mxu0
      %v3017 = vadd.f32 %v2873, %v3016
      %v3018 = vpop.f32.mrf.mxu0
      %3019 = vdwg.mxu0
      %v3020 = vadd.f32 %v2958, %v2852
      %v3021 = vadd.f32 %v2961, %v2853
      %v3022 = vadd.f32 %v2966, %v2854
      %v3023 = vadd.f32 %v2969, %v2855
      %v3024 = vadd.f32 %v2974, %v2856
      %v3025 = vadd.f32 %v2977, %v2857
      %v3026 = vadd.f32 %v2982, %v2858
      %v3027 = vadd.f32 %v2985, %v2859
      %v3028 = vadd.f32 %v2990, %v2860
      %v3029 = vadd.f32 %v2993, %v2861
      %v3030 = vadd.f32 %v2998, %v2862
      %v3031 = vadd.f32 %v3001, %v2863
      %v3032 = vadd.f32 %v3006, %v2864
      %v3033 = vadd.f32 %v3009, %v2865
      %v3034 = vadd.f32 %v3014, %v2866
      %v3035 = vadd.f32 %v3017, %v2867
      %v3036 = vmul.f32 %v3020, 0.01
      %v3037 = vmul.f32 %v3021, 0.01
      %v3038 = vmul.f32 %v3022, 0.01
      %v3039 = vmul.f32 %v3023, 0.01
      %v3040 = vmul.f32 %v3024, 0.01
      %v3041 = vmul.f32 %v3025, 0.01
      %v3042 = vmul.f32 %v3026, 0.01
      %v3043 = vmul.f32 %v3027, 0.01
      %v3044 = vmul.f32 %v3028, 0.01
      %v3045 = vmul.f32 %v3029, 0.01
      %v3046 = vmul.f32 %v3030, 0.01
      %v3047 = vmul.f32 %v3031, 0.01
      %v3048 = vmul.f32 %v3032, 0.01
      %v3049 = vmul.f32 %v3033, 0.01
      %v3050 = vmul.f32 %v3034, 0.01
      %v3051 = vmul.f32 %v3035, 0.01
      %v3052 = vmax.f32 %v3020, %v3036
      %v3053 = vmax.f32 %v3021, %v3037
      %v3054 = vmax.f32 %v3022, %v3038
      %v3055 = vmax.f32 %v3023, %v3039
      %v3056 = vmax.f32 %v3024, %v3040
      %v3057 = vmax.f32 %v3025, %v3041
      %v3058 = vmax.f32 %v3026, %v3042
      %v3059 = vmax.f32 %v3027, %v3043
      %v3060 = vmax.f32 %v3028, %v3044
      %v3061 = vmax.f32 %v3029, %v3045
      %v3062 = vmax.f32 %v3030, %v3046
      %v3063 = vmax.f32 %v3031, %v3047
      %v3064 = vmax.f32 %v3032, %v3048
      %v3065 = vmax.f32 %v3033, %v3049
      %v3066 = vmax.f32 %v3034, %v3050
      %v3067 = vmax.f32 %v3035, %v3051
      %3068 = vst [vmem:[%s382] sm:$0xff] %v3052
      %3069 = vst [vmem:[%s382 + $0x8] sm:$0xff] %v3053
      %3070 = vst [vmem:[%s382 + $0x10] sm:$0xff] %v3054
      %3071 = vst [vmem:[%s382 + $0x18] sm:$0xff] %v3055
      %3072 = vst [vmem:[%s382 + $0x20] sm:$0xff] %v3056
      %3073 = vst [vmem:[%s382 + $0x28] sm:$0xff] %v3057
      %3074 = vst [vmem:[%s382 + $0x30] sm:$0xff] %v3058
      %3075 = vst [vmem:[%s382 + $0x38] sm:$0xff] %v3059
      %3076 = vst [vmem:[%s382 + $0x40] sm:$0xff] %v3060
      %3077 = vst [vmem:[%s382 + $0x48] sm:$0xff] %v3061
      %3078 = vst [vmem:[%s382 + $0x50] sm:$0xff] %v3062
      %3079 = vst [vmem:[%s382 + $0x58] sm:$0xff] %v3063
      %3080 = vst [vmem:[%s382 + $0x60] sm:$0xff] %v3064
      %3081 = vst [vmem:[%s382 + $0x68] sm:$0xff] %v3065
      %3082 = vst [vmem:[%s382 + $0x70] sm:$0xff] %v3066
      %3083 = vst [vmem:[%s382 + $0x78] sm:$0xff] %v3067
      %s3084 = smul.u32 8, %s24
      %p3085 = scmp.lt.s32.totalorder %s23, 1
      %s3086 = scalar_select %p3085, %s23, 1
      %p3087 = scmp.lt.s32.totalorder %s3084, 15
      %s3088 = scalar_select %p3087, %s3084, 15
      %s3089 = smul.addr %s3088, 2
      %s3090 = smul.addr %s3086, 32
      %s3091 = sadd.s32 %s3089, %s3090
      %s3092 = smul.addr %s3091, 8
      %s3093 = scalar_lea.vmem %s8, %s3092
      // Predicated region
      $region53: #{_lambda_.1} parent=51 // pred_check
        %p3094 = pneg %p235
      $region54: #{_lambda_.1} parent=51 // pred_check_branch
        %3096 = sbr.rel (%p3094) target = $region56
      $region55: #{_lambda_.1} parent=51 // pred_region
        %s3097 = smul.u32 8, %s24
      $region56: #{_lambda_.1} parent=51 // pred_fallthru
        _
    $region52: #{_lambda_.1} parent=5 // pred_fallthru
      _
    %p3098 = scmp.le.s32.totalorder 2, %s14
    // Predicated region
    $region57: #{_lambda_.1} parent=5 // pred_check
      %p3099 = pneg %p3098
    $region58: #{_lambda_.1} parent=5 // pred_check_branch
      %3101 = sbr.rel (%p3099) target = $region60
    $region59: #{_lambda_.1} parent=5 // pred_region
      %s3102 = ssub.s32 %s14, 2
      // Predicated region
      $region61: #{_lambda_.1} parent=59 // pred_check
        %p3103 = pneg %p241
      $region62: #{_lambda_.1} parent=59 // pred_check_branch
        %3105 = sbr.rel (%p3103) target = $region64
      $region63: #{_lambda_.1} parent=59 // pred_region
        %s3106 = smul.u32 8, %s26
        %p3107 = scmp.lt.s32.totalorder %s25, 1
        %s3108 = scalar_select %p3107, %s25, 1
        %p3109 = scmp.lt.s32.totalorder %s3106, 15
        %s3110 = scalar_select %p3109, %s3106, 15
        %s3111 = smul.addr %s3110, 2
        %s3112 = smul.addr %s3108, 32
        %s3113 = sadd.s32 %s3111, %s3112
        %s3114 = smul.addr %s3113, 8
        %s3115 = scalar_lea.vmem %s8, %s3114
      $region64: #{_lambda_.1} parent=59 // pred_fallthru
        _
    $region60: #{_lambda_.1} parent=5 // pred_fallthru
      _
  $region6: #{_lambda_.1} parent=0 // loop_footer
    %s18 = sadd.s32 1, %s14
  $region7: #{_lambda_.1} parent=0 // loop_footer_branch
    %13 = sbr.rel target = $region3
  $region8: #{_lambda_.1} parent=0 // loop_exit
    _

</llo_original>
